<compile_context>
chip_gen: v7x
topology: tpu7x:2x2x1
jax: 0.10.0
libtpu: 0.0.40
codegen_flags: <defaults>
</compile_context>

<pallas_src>
import functools

import jax
import jax.numpy as jnp
import numpy as np
from jax.experimental import pallas as pl
from jax.experimental.pallas import tpu as pltpu

B = 4      # batch size (examples per forward)
D = 32     # embedding dim (opts.embedding_dim stand-in)
V = 16     # nonterminal vocabulary size
L = 8      # tokens per AST (bag-of-tokens length)
G = 8      # number of tactic groups
SUB = 8    # TPU sublane multiple: every row dimension is padded to this

# In-script replacements for ./tactic_groups.json etc. (no file reads).
TACTIC_GROUPS = {
    "apply":     ["apply", "eapply"],
    "rewrite":   ["rewrite", "erewrite"],
    "intro":     ["intro", "intros"],
    "induction": ["induction"],
    "simpl":     ["simpl", "cbn"],
    "auto":      ["auto", "eauto"],
    "destruct":  ["destruct"],
    "other":     [],
}
TACTIC_GROUPS_REVERSE = {t: g for g, ts in TACTIC_GROUPS.items() for t in ts}
GROUP_KEYS = list(TACTIC_GROUPS.keys())
assert len(GROUP_KEYS) == G


def _round_up(n, m):
    return ((n + m - 1) // m) * m


# --------------------------------------------------------------------------
# Fused forward kernel.
#   goal/lc/gc ids  [N, L] int32     -> bag-of-words in-register
#   -> table matmul -> dense+tanh    (three embedders, stacked params)
#   -> in-kernel 0/1 segment masks   -> segment-sum matmuls
#   -> predictor: split W into 3 D-blocks (no concat), + bias
#   -> log-softmax CE (mean over real examples) + first-max argmax
# Padded batch rows carry target = -1 (zero one-hot -> zero loss); padded
# context rows are excluded by the segment masks.
# --------------------------------------------------------------------------
def _prover_kernel(goal_ids_ref, lc_ids_ref, gc_ids_ref,
                   lc_s_ref, lc_e_ref, gc_s_ref, gc_e_ref,
                   tgt_ref,
                   tables_ref, emb_w_ref, emb_b_ref,
                   pred_w_ref, pred_b_ref,
                   pred_ref, loss_ref, *, inv_batch):
    vocab_size = tables_ref.shape[1]
    emb_dim = tables_ref.shape[2]
    n_groups = pred_b_ref.shape[1]
    bp = goal_ids_ref.shape[0]          # padded batch rows

    def embed(ids_ref, which):
        # bag-of-token counts computed in-register: [N, L] ids -> [N, V] counts
        ids = ids_ref[...]
        n, seq = ids.shape
        vocab = jax.lax.broadcasted_iota(jnp.int32, (n, vocab_size), 1)
        bow = jnp.zeros((n, vocab_size), jnp.float32)
        for l in range(seq):            # static unroll, seq == L (small)
            bow = bow + (ids[:, l:l + 1] == vocab).astype(jnp.float32)
        h = jnp.dot(bow, tables_ref[which], preferred_element_type=jnp.float32)
        return jnp.tanh(
            jnp.dot(h, emb_w_ref[which], preferred_element_type=jnp.float32)
            + emb_b_ref[which])

    goal_emb = embed(goal_ids_ref, 0)   # [BP, D]
    lc_all = embed(lc_ids_ref, 1)       # [Nlc_pad, D]
    gc_all = embed(gc_ids_ref, 2)       # [Ngc_pad, D]

    def seg_sum(emb_all, s_ref, e_ref):
        # per-example context sum as a 0/1 mask matmul; mask built in-kernel
        n = emb_all.shape[0]
        col = jax.lax.broadcasted_iota(jnp.int32, (bp, n), 1)
        seg = ((col >= s_ref[...]) & (col < e_ref[...])).astype(jnp.float32)
        return jnp.dot(seg, emb_all, preferred_element_type=jnp.float32)

    lc_emb = seg_sum(lc_all, lc_s_ref, lc_e_ref)   # [BP, D]
    gc_emb = seg_sum(gc_all, gc_s_ref, gc_e_ref)   # [BP, D]

    # predictor head: concat(goal, lc, gc) @ W  ==  sum of three partial dots
    logits = (
        jnp.dot(goal_emb, pred_w_ref[0:emb_dim, :],
                preferred_element_type=jnp.float32)
        + jnp.dot(lc_emb, pred_w_ref[emb_dim:2 * emb_dim, :],
                  preferred_element_type=jnp.float32)
        + jnp.dot(gc_emb, pred_w_ref[2 * emb_dim:3 * emb_dim, :],
                  preferred_element_type=jnp.float32)
        + pred_b_ref[...])                         # [BP, G]

    # one-hot targets built in-kernel; padded rows carry -1 -> all-zero row
    gcol = jax.lax.broadcasted_iota(jnp.int32, (bp, n_groups), 1)
    tgt_oh = (gcol == tgt_ref[...]).astype(jnp.float32)

    # CrossEntropyLoss (mean over real examples; padded rows contribute 0)
    m = jnp.max(logits, axis=-1, keepdims=True)
    z = logits - m
    lse = jnp.log(jnp.sum(jnp.exp(z), axis=-1, keepdims=True))
    per_ex = -jnp.sum(tgt_oh * (z - lse), axis=-1, keepdims=True)   # [BP, 1]
    loss_ref[...] = jnp.sum(per_ex, axis=0, keepdims=True) * inv_batch

    # argmax with torch-style first-max tie-break
    is_max = logits == m
    pred_ref[...] = jnp.min(
        jnp.where(is_max, gcol, jnp.int32(n_groups)),
        axis=-1, keepdims=True)


def _prover_call(goal_ids, lc_ids, gc_ids,
                 lc_s, lc_e, gc_s, gc_e, targets,
                 tables, emb_w, emb_b, pred_w, pred_b, *, n_real):
    def vmem():
        return pl.BlockSpec(memory_space=pltpu.MemorySpace.VMEM)

    kernel = functools.partial(_prover_kernel, inv_batch=1.0 / float(n_real))
    return pl.pallas_call(
        kernel,
        out_shape=(
            jax.ShapeDtypeStruct((goal_ids.shape[0], 1), jnp.int32),   # argmax
            jax.ShapeDtypeStruct((1, 1), jnp.float32),                 # mean CE
        ),
        in_specs=[vmem() for _ in range(13)],
        out_specs=(vmem(), vmem()),
    )(goal_ids, lc_ids, gc_ids, lc_s, lc_e, gc_s, gc_e, targets,
      tables, emb_w, emb_b, pred_w, pred_b)


_prover_call_jit = jax.jit(_prover_call, static_argnames=("n_real",))


# --------------------------------------------------------------------------
# Host-side glue (numpy only: no per-forward XLA ops besides the fused call).
# --------------------------------------------------------------------------
def _pad_rows_np(x, rows):
    x = np.asarray(x, np.int32)
    if x.shape[0] < rows:
        pad = np.zeros((rows - x.shape[0],) + x.shape[1:], np.int32)
        x = np.concatenate([x, pad], axis=0)
    return x


def _segment_bounds_np(sizes, rows):
    starts = np.zeros((rows, 1), np.int32)
    ends = np.zeros((rows, 1), np.int32)
    j = 0
    for i, s in enumerate(sizes):
        starts[i, 0] = j
        ends[i, 0] = j + int(s)
        j += int(s)
    return starts, ends


class ProverPallas:
    def __init__(self, key):
        ks = jax.random.split(key, 11)
        self.emb_tables = jnp.stack(
            [0.1 * jax.random.normal(ks[i], (V, D), jnp.float32) for i in range(3)])
        self.emb_w = jnp.stack(
            [0.1 * jax.random.normal(ks[3 + i], (D, D), jnp.float32) for i in range(3)])
        self.emb_b = jnp.stack(
            [0.01 * jax.random.normal(ks[6 + i], (1, D), jnp.float32) for i in range(3)])
        self.pred_w = 0.1 * jax.random.normal(ks[9], (3 * D, G), jnp.float32)
        self.pred_b = 0.01 * jax.random.normal(ks[10], (1, G), jnp.float32)

    # ---- host-side string logic copied from the PyTorch module ----
    def get_groups(self, tactics):
        return [TACTIC_GROUPS_REVERSE.get(t.split(' ')[0], 'other') for t in tactics]

    def tactic_space_mapping(self, actions):
        other_idx = GROUP_KEYS.index('other')
        return np.asarray(
            [GROUP_KEYS.index(a) if a in GROUP_KEYS else other_idx for a in actions],
            dtype=np.int32)

    def get_groups_preds(self, pred_idx, n):
        return [GROUP_KEYS[int(i)] for i in np.asarray(pred_idx)[:n, 0]]

    # ---- forward ----
    def forward(self, batch):
        n_real = len(batch['tactic_str'])
        bp = _round_up(max(n_real, 1), SUB)

        goal_ids = _pad_rows_np(batch['goal_ids'], bp)
        lc_arr = np.asarray(batch['lc_ids'], np.int32)
        gc_arr = np.asarray(batch['gc_ids'], np.int32)
        lc_ids = _pad_rows_np(lc_arr, _round_up(max(lc_arr.shape[0], 1), SUB))
        gc_ids = _pad_rows_np(gc_arr, _round_up(max(gc_arr.shape[0], 1), SUB))

        lc_s, lc_e = _segment_bounds_np(batch['lc_sizes'], bp)
        gc_s, gc_e = _segment_bounds_np(batch['gc_sizes'], bp)

        true_groups = self.get_groups(batch['tactic_str'])
        targets = self.tactic_space_mapping(true_groups)         # [n_real]
        targets_p = np.full((bp, 1), -1, np.int32)                # -1 = padded
        targets_p[:n_real, 0] = targets

        pred_idx, loss = _prover_call_jit(
            goal_ids, lc_ids, gc_ids, lc_s, lc_e, gc_s, gc_e, targets_p,
            self.emb_tables, self.emb_w, self.emb_b,
            self.pred_w, self.pred_b, n_real=n_real)

        pred_groups = self.get_groups_preds(pred_idx, n_real)
        return pred_groups, true_groups, loss[0, 0]


# TODO(synk): original Embedder/Predictor sub-module code and the JSON tables
# are external; they are replaced by deterministic synthetic equivalents here.

if __name__ == "__main__":
    key = jax.random.PRNGKey(0)
    k_params, k_goal, k_lc, k_gc = jax.random.split(key, 4)

    prover = ProverPallas(k_params)

    lc_sizes = [2, 1, 3, 1]   # local-context ASTs per example
    gc_sizes = [1, 2, 2, 2]   # env ASTs per example
    n_lc, n_gc = sum(lc_sizes), sum(gc_sizes)

    batch = {
        'goal_ids': jax.random.randint(k_goal, (B, L), 0, V),
        'lc_ids':   jax.random.randint(k_lc, (n_lc, L), 0, V),
        'lc_sizes': lc_sizes,
        'gc_ids':   jax.random.randint(k_gc, (n_gc, L), 0, V),
        'gc_sizes': gc_sizes,
        'tactic_str': ["apply H1", "rewrite lemma_foo", "mytactic x y", "intros"],
    }

    pred_groups, true_groups, loss = prover.forward(batch)
    jax.block_until_ready(loss)

    assert len(pred_groups) == B and len(true_groups) == B
    assert bool(jnp.isfinite(loss))
    print("KERNEL_OK")
</pallas_src>

<mosaic_0001>
module attributes {stable_mosaic.version = 11 : i64} {
  func.func @_prover_kernel(%arg0: memref<8x8xi32, #tpu.memory_space<vmem>>, %arg1: memref<8x8xi32, #tpu.memory_space<vmem>>, %arg2: memref<8x8xi32, #tpu.memory_space<vmem>>, %arg3: memref<8x1xi32, #tpu.memory_space<vmem>>, %arg4: memref<8x1xi32, #tpu.memory_space<vmem>>, %arg5: memref<8x1xi32, #tpu.memory_space<vmem>>, %arg6: memref<8x1xi32, #tpu.memory_space<vmem>>, %arg7: memref<8x1xi32, #tpu.memory_space<vmem>>, %arg8: memref<3x16x32xf32, #tpu.memory_space<vmem>>, %arg9: memref<3x32x32xf32, #tpu.memory_space<vmem>>, %arg10: memref<3x1x32xf32, #tpu.memory_space<vmem>>, %arg11: memref<96x8xf32, #tpu.memory_space<vmem>>, %arg12: memref<1x8xf32, #tpu.memory_space<vmem>>, %arg13: memref<8x1xi32, #tpu.memory_space<vmem>>, %arg14: memref<1x1xf32, #tpu.memory_space<vmem>>) attributes {dimension_semantics = [], scalar_prefetch = 0 : i64, scratch_operands = 0 : i64, tpu.core_type = #tpu.core_type<tc>} {
    %c0 = arith.constant 0 : index
    %c0_0 = arith.constant 0 : index
    %0 = vector.load %arg0[%c0, %c0_0] : memref<8x8xi32, #tpu.memory_space<vmem>>, vector<8x8xi32>
    %1 = tpu.iota {dimensions = array<i32: 1>} : vector<8x16xi32>
    %cst = arith.constant 0.000000e+00 : f32
    %2 = vector.broadcast %cst : f32 to vector<8x16xf32>
    %3 = vector.extract_strided_slice %0 {offsets = [0, 0], sizes = [8, 1], strides = [1, 1]} : vector<8x8xi32> to vector<8x1xi32>
    %4 = vector.broadcast %3 : vector<8x1xi32> to vector<8x16xi32>
    %5 = arith.cmpi eq, %4, %1 : vector<8x16xi32>
    %6 = arith.extui %5 : vector<8x16xi1> to vector<8x16xi32>
    %7 = arith.sitofp %6 : vector<8x16xi32> to vector<8x16xf32>
    %8 = arith.addf %2, %7 : vector<8x16xf32>
    %9 = vector.extract_strided_slice %0 {offsets = [0, 1], sizes = [8, 1], strides = [1, 1]} : vector<8x8xi32> to vector<8x1xi32>
    %10 = vector.broadcast %9 : vector<8x1xi32> to vector<8x16xi32>
    %11 = arith.cmpi eq, %10, %1 : vector<8x16xi32>
    %12 = arith.extui %11 : vector<8x16xi1> to vector<8x16xi32>
    %13 = arith.sitofp %12 : vector<8x16xi32> to vector<8x16xf32>
    %14 = arith.addf %8, %13 : vector<8x16xf32>
    %15 = vector.extract_strided_slice %0 {offsets = [0, 2], sizes = [8, 1], strides = [1, 1]} : vector<8x8xi32> to vector<8x1xi32>
    %16 = vector.broadcast %15 : vector<8x1xi32> to vector<8x16xi32>
    %17 = arith.cmpi eq, %16, %1 : vector<8x16xi32>
    %18 = arith.extui %17 : vector<8x16xi1> to vector<8x16xi32>
    %19 = arith.sitofp %18 : vector<8x16xi32> to vector<8x16xf32>
    %20 = arith.addf %14, %19 : vector<8x16xf32>
    %21 = vector.extract_strided_slice %0 {offsets = [0, 3], sizes = [8, 1], strides = [1, 1]} : vector<8x8xi32> to vector<8x1xi32>
    %22 = vector.broadcast %21 : vector<8x1xi32> to vector<8x16xi32>
    %23 = arith.cmpi eq, %22, %1 : vector<8x16xi32>
    %24 = arith.extui %23 : vector<8x16xi1> to vector<8x16xi32>
    %25 = arith.sitofp %24 : vector<8x16xi32> to vector<8x16xf32>
    %26 = arith.addf %20, %25 : vector<8x16xf32>
    %27 = vector.extract_strided_slice %0 {offsets = [0, 4], sizes = [8, 1], strides = [1, 1]} : vector<8x8xi32> to vector<8x1xi32>
    %28 = vector.broadcast %27 : vector<8x1xi32> to vector<8x16xi32>
    %29 = arith.cmpi eq, %28, %1 : vector<8x16xi32>
    %30 = arith.extui %29 : vector<8x16xi1> to vector<8x16xi32>
    %31 = arith.sitofp %30 : vector<8x16xi32> to vector<8x16xf32>
    %32 = arith.addf %26, %31 : vector<8x16xf32>
    %33 = vector.extract_strided_slice %0 {offsets = [0, 5], sizes = [8, 1], strides = [1, 1]} : vector<8x8xi32> to vector<8x1xi32>
    %34 = vector.broadcast %33 : vector<8x1xi32> to vector<8x16xi32>
    %35 = arith.cmpi eq, %34, %1 : vector<8x16xi32>
    %36 = arith.extui %35 : vector<8x16xi1> to vector<8x16xi32>
    %37 = arith.sitofp %36 : vector<8x16xi32> to vector<8x16xf32>
    %38 = arith.addf %32, %37 : vector<8x16xf32>
    %39 = vector.extract_strided_slice %0 {offsets = [0, 6], sizes = [8, 1], strides = [1, 1]} : vector<8x8xi32> to vector<8x1xi32>
    %40 = vector.broadcast %39 : vector<8x1xi32> to vector<8x16xi32>
    %41 = arith.cmpi eq, %40, %1 : vector<8x16xi32>
    %42 = arith.extui %41 : vector<8x16xi1> to vector<8x16xi32>
    %43 = arith.sitofp %42 : vector<8x16xi32> to vector<8x16xf32>
    %44 = arith.addf %38, %43 : vector<8x16xf32>
    %45 = vector.extract_strided_slice %0 {offsets = [0, 7], sizes = [8, 1], strides = [1, 1]} : vector<8x8xi32> to vector<8x1xi32>
    %46 = vector.broadcast %45 : vector<8x1xi32> to vector<8x16xi32>
    %47 = arith.cmpi eq, %46, %1 : vector<8x16xi32>
    %48 = arith.extui %47 : vector<8x16xi1> to vector<8x16xi32>
    %49 = arith.sitofp %48 : vector<8x16xi32> to vector<8x16xf32>
    %50 = arith.addf %44, %49 : vector<8x16xf32>
    %c0_1 = arith.constant 0 : index
    %c0_2 = arith.constant 0 : index
    %c0_3 = arith.constant 0 : index
    %51 = vector.load %arg8[%c0_1, %c0_2, %c0_3] : memref<3x16x32xf32, #tpu.memory_space<vmem>>, vector<1x16x32xf32>
    %52 = vector.shape_cast %51 : vector<1x16x32xf32> to vector<16x32xf32>
    %cst_4 = arith.constant dense<0.000000e+00> : vector<8x32xf32>
    %53 = tpu.matmul %50, %52, %cst_4 {dimension_numbers = #tpu.dot_dimension_numbers<[1], [0], [0], [1], [0, 0, 1, 1], [], []>} : vector<8x16xf32>, vector<16x32xf32>, vector<8x32xf32> -> vector<8x32xf32>
    %c0_5 = arith.constant 0 : index
    %c0_6 = arith.constant 0 : index
    %c0_7 = arith.constant 0 : index
    %54 = vector.load %arg9[%c0_5, %c0_6, %c0_7] : memref<3x32x32xf32, #tpu.memory_space<vmem>>, vector<1x32x32xf32>
    %55 = vector.shape_cast %54 : vector<1x32x32xf32> to vector<32x32xf32>
    %cst_8 = arith.constant dense<0.000000e+00> : vector<8x32xf32>
    %56 = tpu.matmul %53, %55, %cst_8 {dimension_numbers = #tpu.dot_dimension_numbers<[1], [0], [0], [1], [0, 0, 1, 1], [], []>} : vector<8x32xf32>, vector<32x32xf32>, vector<8x32xf32> -> vector<8x32xf32>
    %c0_9 = arith.constant 0 : index
    %c0_10 = arith.constant 0 : index
    %c0_11 = arith.constant 0 : index
    %57 = vector.load %arg10[%c0_9, %c0_10, %c0_11] : memref<3x1x32xf32, #tpu.memory_space<vmem>>, vector<1x1x32xf32>
    %58 = vector.shape_cast %57 : vector<1x1x32xf32> to vector<1x32xf32>
    %59 = vector.broadcast %58 : vector<1x32xf32> to vector<8x32xf32>
    %60 = arith.addf %56, %59 : vector<8x32xf32>
    %61 = math.tanh %60 : vector<8x32xf32>
    %c0_12 = arith.constant 0 : index
    %c0_13 = arith.constant 0 : index
    %62 = vector.load %arg1[%c0_12, %c0_13] : memref<8x8xi32, #tpu.memory_space<vmem>>, vector<8x8xi32>
    %63 = tpu.iota {dimensions = array<i32: 1>} : vector<8x16xi32>
    %cst_14 = arith.constant 0.000000e+00 : f32
    %64 = vector.broadcast %cst_14 : f32 to vector<8x16xf32>
    %65 = vector.extract_strided_slice %62 {offsets = [0, 0], sizes = [8, 1], strides = [1, 1]} : vector<8x8xi32> to vector<8x1xi32>
    %66 = vector.broadcast %65 : vector<8x1xi32> to vector<8x16xi32>
    %67 = arith.cmpi eq, %66, %63 : vector<8x16xi32>
    %68 = arith.extui %67 : vector<8x16xi1> to vector<8x16xi32>
    %69 = arith.sitofp %68 : vector<8x16xi32> to vector<8x16xf32>
    %70 = arith.addf %64, %69 : vector<8x16xf32>
    %71 = vector.extract_strided_slice %62 {offsets = [0, 1], sizes = [8, 1], strides = [1, 1]} : vector<8x8xi32> to vector<8x1xi32>
    %72 = vector.broadcast %71 : vector<8x1xi32> to vector<8x16xi32>
    %73 = arith.cmpi eq, %72, %63 : vector<8x16xi32>
    %74 = arith.extui %73 : vector<8x16xi1> to vector<8x16xi32>
    %75 = arith.sitofp %74 : vector<8x16xi32> to vector<8x16xf32>
    %76 = arith.addf %70, %75 : vector<8x16xf32>
    %77 = vector.extract_strided_slice %62 {offsets = [0, 2], sizes = [8, 1], strides = [1, 1]} : vector<8x8xi32> to vector<8x1xi32>
    %78 = vector.broadcast %77 : vector<8x1xi32> to vector<8x16xi32>
    %79 = arith.cmpi eq, %78, %63 : vector<8x16xi32>
    %80 = arith.extui %79 : vector<8x16xi1> to vector<8x16xi32>
    %81 = arith.sitofp %80 : vector<8x16xi32> to vector<8x16xf32>
    %82 = arith.addf %76, %81 : vector<8x16xf32>
    %83 = vector.extract_strided_slice %62 {offsets = [0, 3], sizes = [8, 1], strides = [1, 1]} : vector<8x8xi32> to vector<8x1xi32>
    %84 = vector.broadcast %83 : vector<8x1xi32> to vector<8x16xi32>
    %85 = arith.cmpi eq, %84, %63 : vector<8x16xi32>
    %86 = arith.extui %85 : vector<8x16xi1> to vector<8x16xi32>
    %87 = arith.sitofp %86 : vector<8x16xi32> to vector<8x16xf32>
    %88 = arith.addf %82, %87 : vector<8x16xf32>
    %89 = vector.extract_strided_slice %62 {offsets = [0, 4], sizes = [8, 1], strides = [1, 1]} : vector<8x8xi32> to vector<8x1xi32>
    %90 = vector.broadcast %89 : vector<8x1xi32> to vector<8x16xi32>
    %91 = arith.cmpi eq, %90, %63 : vector<8x16xi32>
    %92 = arith.extui %91 : vector<8x16xi1> to vector<8x16xi32>
    %93 = arith.sitofp %92 : vector<8x16xi32> to vector<8x16xf32>
    %94 = arith.addf %88, %93 : vector<8x16xf32>
    %95 = vector.extract_strided_slice %62 {offsets = [0, 5], sizes = [8, 1], strides = [1, 1]} : vector<8x8xi32> to vector<8x1xi32>
    %96 = vector.broadcast %95 : vector<8x1xi32> to vector<8x16xi32>
    %97 = arith.cmpi eq, %96, %63 : vector<8x16xi32>
    %98 = arith.extui %97 : vector<8x16xi1> to vector<8x16xi32>
    %99 = arith.sitofp %98 : vector<8x16xi32> to vector<8x16xf32>
    %100 = arith.addf %94, %99 : vector<8x16xf32>
    %101 = vector.extract_strided_slice %62 {offsets = [0, 6], sizes = [8, 1], strides = [1, 1]} : vector<8x8xi32> to vector<8x1xi32>
    %102 = vector.broadcast %101 : vector<8x1xi32> to vector<8x16xi32>
    %103 = arith.cmpi eq, %102, %63 : vector<8x16xi32>
    %104 = arith.extui %103 : vector<8x16xi1> to vector<8x16xi32>
    %105 = arith.sitofp %104 : vector<8x16xi32> to vector<8x16xf32>
    %106 = arith.addf %100, %105 : vector<8x16xf32>
    %107 = vector.extract_strided_slice %62 {offsets = [0, 7], sizes = [8, 1], strides = [1, 1]} : vector<8x8xi32> to vector<8x1xi32>
    %108 = vector.broadcast %107 : vector<8x1xi32> to vector<8x16xi32>
    %109 = arith.cmpi eq, %108, %63 : vector<8x16xi32>
    %110 = arith.extui %109 : vector<8x16xi1> to vector<8x16xi32>
    %111 = arith.sitofp %110 : vector<8x16xi32> to vector<8x16xf32>
    %112 = arith.addf %106, %111 : vector<8x16xf32>
    %c1 = arith.constant 1 : index
    %c0_15 = arith.constant 0 : index
    %c0_16 = arith.constant 0 : index
    %113 = vector.load %arg8[%c1, %c0_15, %c0_16] : memref<3x16x32xf32, #tpu.memory_space<vmem>>, vector<1x16x32xf32>
    %114 = vector.shape_cast %113 : vector<1x16x32xf32> to vector<16x32xf32>
    %cst_17 = arith.constant dense<0.000000e+00> : vector<8x32xf32>
    %115 = tpu.matmul %112, %114, %cst_17 {dimension_numbers = #tpu.dot_dimension_numbers<[1], [0], [0], [1], [0, 0, 1, 1], [], []>} : vector<8x16xf32>, vector<16x32xf32>, vector<8x32xf32> -> vector<8x32xf32>
    %c1_18 = arith.constant 1 : index
    %c0_19 = arith.constant 0 : index
    %c0_20 = arith.constant 0 : index
    %116 = vector.load %arg9[%c1_18, %c0_19, %c0_20] : memref<3x32x32xf32, #tpu.memory_space<vmem>>, vector<1x32x32xf32>
    %117 = vector.shape_cast %116 : vector<1x32x32xf32> to vector<32x32xf32>
    %cst_21 = arith.constant dense<0.000000e+00> : vector<8x32xf32>
    %118 = tpu.matmul %115, %117, %cst_21 {dimension_numbers = #tpu.dot_dimension_numbers<[1], [0], [0], [1], [0, 0, 1, 1], [], []>} : vector<8x32xf32>, vector<32x32xf32>, vector<8x32xf32> -> vector<8x32xf32>
    %c1_22 = arith.constant 1 : index
    %c0_23 = arith.constant 0 : index
    %c0_24 = arith.constant 0 : index
    %119 = vector.load %arg10[%c1_22, %c0_23, %c0_24] : memref<3x1x32xf32, #tpu.memory_space<vmem>>, vector<1x1x32xf32>
    %120 = vector.shape_cast %119 : vector<1x1x32xf32> to vector<1x32xf32>
    %121 = vector.broadcast %120 : vector<1x32xf32> to vector<8x32xf32>
    %122 = arith.addf %118, %121 : vector<8x32xf32>
    %123 = math.tanh %122 : vector<8x32xf32>
    %c0_25 = arith.constant 0 : index
    %c0_26 = arith.constant 0 : index
    %124 = vector.load %arg2[%c0_25, %c0_26] : memref<8x8xi32, #tpu.memory_space<vmem>>, vector<8x8xi32>
    %125 = tpu.iota {dimensions = array<i32: 1>} : vector<8x16xi32>
    %cst_27 = arith.constant 0.000000e+00 : f32
    %126 = vector.broadcast %cst_27 : f32 to vector<8x16xf32>
    %127 = vector.extract_strided_slice %124 {offsets = [0, 0], sizes = [8, 1], strides = [1, 1]} : vector<8x8xi32> to vector<8x1xi32>
    %128 = vector.broadcast %127 : vector<8x1xi32> to vector<8x16xi32>
    %129 = arith.cmpi eq, %128, %125 : vector<8x16xi32>
    %130 = arith.extui %129 : vector<8x16xi1> to vector<8x16xi32>
    %131 = arith.sitofp %130 : vector<8x16xi32> to vector<8x16xf32>
    %132 = arith.addf %126, %131 : vector<8x16xf32>
    %133 = vector.extract_strided_slice %124 {offsets = [0, 1], sizes = [8, 1], strides = [1, 1]} : vector<8x8xi32> to vector<8x1xi32>
    %134 = vector.broadcast %133 : vector<8x1xi32> to vector<8x16xi32>
    %135 = arith.cmpi eq, %134, %125 : vector<8x16xi32>
    %136 = arith.extui %135 : vector<8x16xi1> to vector<8x16xi32>
    %137 = arith.sitofp %136 : vector<8x16xi32> to vector<8x16xf32>
    %138 = arith.addf %132, %137 : vector<8x16xf32>
    %139 = vector.extract_strided_slice %124 {offsets = [0, 2], sizes = [8, 1], strides = [1, 1]} : vector<8x8xi32> to vector<8x1xi32>
    %140 = vector.broadcast %139 : vector<8x1xi32> to vector<8x16xi32>
    %141 = arith.cmpi eq, %140, %125 : vector<8x16xi32>
    %142 = arith.extui %141 : vector<8x16xi1> to vector<8x16xi32>
    %143 = arith.sitofp %142 : vector<8x16xi32> to vector<8x16xf32>
    %144 = arith.addf %138, %143 : vector<8x16xf32>
    %145 = vector.extract_strided_slice %124 {offsets = [0, 3], sizes = [8, 1], strides = [1, 1]} : vector<8x8xi32> to vector<8x1xi32>
    %146 = vector.broadcast %145 : vector<8x1xi32> to vector<8x16xi32>
    %147 = arith.cmpi eq, %146, %125 : vector<8x16xi32>
    %148 = arith.extui %147 : vector<8x16xi1> to vector<8x16xi32>
    %149 = arith.sitofp %148 : vector<8x16xi32> to vector<8x16xf32>
    %150 = arith.addf %144, %149 : vector<8x16xf32>
    %151 = vector.extract_strided_slice %124 {offsets = [0, 4], sizes = [8, 1], strides = [1, 1]} : vector<8x8xi32> to vector<8x1xi32>
    %152 = vector.broadcast %151 : vector<8x1xi32> to vector<8x16xi32>
    %153 = arith.cmpi eq, %152, %125 : vector<8x16xi32>
    %154 = arith.extui %153 : vector<8x16xi1> to vector<8x16xi32>
    %155 = arith.sitofp %154 : vector<8x16xi32> to vector<8x16xf32>
    %156 = arith.addf %150, %155 : vector<8x16xf32>
    %157 = vector.extract_strided_slice %124 {offsets = [0, 5], sizes = [8, 1], strides = [1, 1]} : vector<8x8xi32> to vector<8x1xi32>
    %158 = vector.broadcast %157 : vector<8x1xi32> to vector<8x16xi32>
    %159 = arith.cmpi eq, %158, %125 : vector<8x16xi32>
    %160 = arith.extui %159 : vector<8x16xi1> to vector<8x16xi32>
    %161 = arith.sitofp %160 : vector<8x16xi32> to vector<8x16xf32>
    %162 = arith.addf %156, %161 : vector<8x16xf32>
    %163 = vector.extract_strided_slice %124 {offsets = [0, 6], sizes = [8, 1], strides = [1, 1]} : vector<8x8xi32> to vector<8x1xi32>
    %164 = vector.broadcast %163 : vector<8x1xi32> to vector<8x16xi32>
    %165 = arith.cmpi eq, %164, %125 : vector<8x16xi32>
    %166 = arith.extui %165 : vector<8x16xi1> to vector<8x16xi32>
    %167 = arith.sitofp %166 : vector<8x16xi32> to vector<8x16xf32>
    %168 = arith.addf %162, %167 : vector<8x16xf32>
    %169 = vector.extract_strided_slice %124 {offsets = [0, 7], sizes = [8, 1], strides = [1, 1]} : vector<8x8xi32> to vector<8x1xi32>
    %170 = vector.broadcast %169 : vector<8x1xi32> to vector<8x16xi32>
    %171 = arith.cmpi eq, %170, %125 : vector<8x16xi32>
    %172 = arith.extui %171 : vector<8x16xi1> to vector<8x16xi32>
    %173 = arith.sitofp %172 : vector<8x16xi32> to vector<8x16xf32>
    %174 = arith.addf %168, %173 : vector<8x16xf32>
    %c2 = arith.constant 2 : index
    %c0_28 = arith.constant 0 : index
    %c0_29 = arith.constant 0 : index
    %175 = vector.load %arg8[%c2, %c0_28, %c0_29] : memref<3x16x32xf32, #tpu.memory_space<vmem>>, vector<1x16x32xf32>
    %176 = vector.shape_cast %175 : vector<1x16x32xf32> to vector<16x32xf32>
    %cst_30 = arith.constant dense<0.000000e+00> : vector<8x32xf32>
    %177 = tpu.matmul %174, %176, %cst_30 {dimension_numbers = #tpu.dot_dimension_numbers<[1], [0], [0], [1], [0, 0, 1, 1], [], []>} : vector<8x16xf32>, vector<16x32xf32>, vector<8x32xf32> -> vector<8x32xf32>
    %c2_31 = arith.constant 2 : index
    %c0_32 = arith.constant 0 : index
    %c0_33 = arith.constant 0 : index
    %178 = vector.load %arg9[%c2_31, %c0_32, %c0_33] : memref<3x32x32xf32, #tpu.memory_space<vmem>>, vector<1x32x32xf32>
    %179 = vector.shape_cast %178 : vector<1x32x32xf32> to vector<32x32xf32>
    %cst_34 = arith.constant dense<0.000000e+00> : vector<8x32xf32>
    %180 = tpu.matmul %177, %179, %cst_34 {dimension_numbers = #tpu.dot_dimension_numbers<[1], [0], [0], [1], [0, 0, 1, 1], [], []>} : vector<8x32xf32>, vector<32x32xf32>, vector<8x32xf32> -> vector<8x32xf32>
    %c2_35 = arith.constant 2 : index
    %c0_36 = arith.constant 0 : index
    %c0_37 = arith.constant 0 : index
    %181 = vector.load %arg10[%c2_35, %c0_36, %c0_37] : memref<3x1x32xf32, #tpu.memory_space<vmem>>, vector<1x1x32xf32>
    %182 = vector.shape_cast %181 : vector<1x1x32xf32> to vector<1x32xf32>
    %183 = vector.broadcast %182 : vector<1x32xf32> to vector<8x32xf32>
    %184 = arith.addf %180, %183 : vector<8x32xf32>
    %185 = math.tanh %184 : vector<8x32xf32>
    %186 = tpu.iota {dimensions = array<i32: 1>} : vector<8x8xi32>
    %c0_38 = arith.constant 0 : index
    %c0_39 = arith.constant 0 : index
    %187 = vector.load %arg3[%c0_38, %c0_39] : memref<8x1xi32, #tpu.memory_space<vmem>>, vector<8x1xi32>
    %188 = vector.broadcast %187 : vector<8x1xi32> to vector<8x8xi32>
    %189 = arith.cmpi sge, %186, %188 : vector<8x8xi32>
    %c0_40 = arith.constant 0 : index
    %c0_41 = arith.constant 0 : index
    %190 = vector.load %arg4[%c0_40, %c0_41] : memref<8x1xi32, #tpu.memory_space<vmem>>, vector<8x1xi32>
    %191 = vector.broadcast %190 : vector<8x1xi32> to vector<8x8xi32>
    %192 = arith.cmpi slt, %186, %191 : vector<8x8xi32>
    %193 = arith.andi %189, %192 : vector<8x8xi1>
    %194 = arith.extui %193 : vector<8x8xi1> to vector<8x8xi32>
    %195 = arith.sitofp %194 : vector<8x8xi32> to vector<8x8xf32>
    %cst_42 = arith.constant dense<0.000000e+00> : vector<8x32xf32>
    %196 = tpu.matmul %195, %123, %cst_42 {dimension_numbers = #tpu.dot_dimension_numbers<[1], [0], [0], [1], [0, 0, 1, 1], [], []>} : vector<8x8xf32>, vector<8x32xf32>, vector<8x32xf32> -> vector<8x32xf32>
    %197 = tpu.iota {dimensions = array<i32: 1>} : vector<8x8xi32>
    %c0_43 = arith.constant 0 : index
    %c0_44 = arith.constant 0 : index
    %198 = vector.load %arg5[%c0_43, %c0_44] : memref<8x1xi32, #tpu.memory_space<vmem>>, vector<8x1xi32>
    %199 = vector.broadcast %198 : vector<8x1xi32> to vector<8x8xi32>
    %200 = arith.cmpi sge, %197, %199 : vector<8x8xi32>
    %c0_45 = arith.constant 0 : index
    %c0_46 = arith.constant 0 : index
    %201 = vector.load %arg6[%c0_45, %c0_46] : memref<8x1xi32, #tpu.memory_space<vmem>>, vector<8x1xi32>
    %202 = vector.broadcast %201 : vector<8x1xi32> to vector<8x8xi32>
    %203 = arith.cmpi slt, %197, %202 : vector<8x8xi32>
    %204 = arith.andi %200, %203 : vector<8x8xi1>
    %205 = arith.extui %204 : vector<8x8xi1> to vector<8x8xi32>
    %206 = arith.sitofp %205 : vector<8x8xi32> to vector<8x8xf32>
    %cst_47 = arith.constant dense<0.000000e+00> : vector<8x32xf32>
    %207 = tpu.matmul %206, %185, %cst_47 {dimension_numbers = #tpu.dot_dimension_numbers<[1], [0], [0], [1], [0, 0, 1, 1], [], []>} : vector<8x8xf32>, vector<8x32xf32>, vector<8x32xf32> -> vector<8x32xf32>
    %c0_48 = arith.constant 0 : index
    %c0_49 = arith.constant 0 : index
    %208 = vector.load %arg11[%c0_48, %c0_49] : memref<96x8xf32, #tpu.memory_space<vmem>>, vector<32x8xf32>
    %cst_50 = arith.constant dense<0.000000e+00> : vector<8x8xf32>
    %209 = tpu.matmul %61, %208, %cst_50 {dimension_numbers = #tpu.dot_dimension_numbers<[1], [0], [0], [1], [0, 0, 1, 1], [], []>} : vector<8x32xf32>, vector<32x8xf32>, vector<8x8xf32> -> vector<8x8xf32>
    %c32 = arith.constant 32 : index
    %c0_51 = arith.constant 0 : index
    %210 = vector.load %arg11[%c32, %c0_51] : memref<96x8xf32, #tpu.memory_space<vmem>>, vector<32x8xf32>
    %cst_52 = arith.constant dense<0.000000e+00> : vector<8x8xf32>
    %211 = tpu.matmul %196, %210, %cst_52 {dimension_numbers = #tpu.dot_dimension_numbers<[1], [0], [0], [1], [0, 0, 1, 1], [], []>} : vector<8x32xf32>, vector<32x8xf32>, vector<8x8xf32> -> vector<8x8xf32>
    %212 = arith.addf %209, %211 : vector<8x8xf32>
    %c64 = arith.constant 64 : index
    %c0_53 = arith.constant 0 : index
    %213 = vector.load %arg11[%c64, %c0_53] : memref<96x8xf32, #tpu.memory_space<vmem>>, vector<32x8xf32>
    %cst_54 = arith.constant dense<0.000000e+00> : vector<8x8xf32>
    %214 = tpu.matmul %207, %213, %cst_54 {dimension_numbers = #tpu.dot_dimension_numbers<[1], [0], [0], [1], [0, 0, 1, 1], [], []>} : vector<8x32xf32>, vector<32x8xf32>, vector<8x8xf32> -> vector<8x8xf32>
    %215 = arith.addf %212, %214 : vector<8x8xf32>
    %c0_55 = arith.constant 0 : index
    %c0_56 = arith.constant 0 : index
    %216 = vector.load %arg12[%c0_55, %c0_56] : memref<1x8xf32, #tpu.memory_space<vmem>>, vector<1x8xf32>
    %217 = vector.broadcast %216 : vector<1x8xf32> to vector<8x8xf32>
    %218 = arith.addf %215, %217 : vector<8x8xf32>
    %219 = tpu.iota {dimensions = array<i32: 1>} : vector<8x8xi32>
    %c0_57 = arith.constant 0 : index
    %c0_58 = arith.constant 0 : index
    %220 = vector.load %arg7[%c0_57, %c0_58] : memref<8x1xi32, #tpu.memory_space<vmem>>, vector<8x1xi32>
    %221 = vector.broadcast %220 : vector<8x1xi32> to vector<8x8xi32>
    %222 = arith.cmpi eq, %219, %221 : vector<8x8xi32>
    %223 = arith.extui %222 : vector<8x8xi1> to vector<8x8xi32>
    %224 = arith.sitofp %223 : vector<8x8xi32> to vector<8x8xf32>
    %cst_59 = arith.constant dense<0xFF800000> : vector<8xf32>
    %225 = vector.multi_reduction <maximumf>, %218, %cst_59 [1] : vector<8x8xf32> to vector<8xf32>
    %226 = vector.shape_cast %225 : vector<8xf32> to vector<8x1xf32>
    %227 = vector.broadcast %226 : vector<8x1xf32> to vector<8x8xf32>
    %228 = arith.subf %218, %227 : vector<8x8xf32>
    %229 = math.exp %228 : vector<8x8xf32>
    %cst_60 = arith.constant dense<0.000000e+00> : vector<8xf32>
    %230 = vector.multi_reduction <add>, %229, %cst_60 [1] : vector<8x8xf32> to vector<8xf32>
    %231 = vector.shape_cast %230 : vector<8xf32> to vector<8x1xf32>
    %232 = math.log %231 : vector<8x1xf32>
    %233 = vector.broadcast %232 : vector<8x1xf32> to vector<8x8xf32>
    %234 = arith.subf %228, %233 : vector<8x8xf32>
    %235 = arith.mulf %224, %234 : vector<8x8xf32>
    %cst_61 = arith.constant dense<0.000000e+00> : vector<8xf32>
    %236 = vector.multi_reduction <add>, %235, %cst_61 [1] : vector<8x8xf32> to vector<8xf32>
    %237 = vector.shape_cast %236 : vector<8xf32> to vector<8x1xf32>
    %cst_62 = arith.constant 0.000000e+00 : f32
    %238 = vector.broadcast %cst_62 : f32 to vector<8x1xf32>
    %239 = arith.subf %238, %237 : vector<8x1xf32>
    %cst_63 = arith.constant dense<0.000000e+00> : vector<1xf32>
    %240 = vector.multi_reduction <add>, %239, %cst_63 [0] : vector<8x1xf32> to vector<1xf32>
    %241 = vector.shape_cast %240 : vector<1xf32> to vector<1x1xf32>
    %cst_64 = arith.constant 2.500000e-01 : f32
    %242 = vector.broadcast %cst_64 : f32 to vector<1x1xf32>
    %243 = arith.mulf %241, %242 : vector<1x1xf32>
    %c0_65 = arith.constant 0 : index
    %c0_66 = arith.constant 0 : index
    %244 = vector.load %arg14[%c0_65, %c0_66] : memref<1x1xf32, #tpu.memory_space<vmem>>, vector<1x1xf32>
    tpu.vector_store %arg14[%c0_65, %c0_66], %243 {strides = array<i32>} : memref<1x1xf32, #tpu.memory_space<vmem>>, vector<1x1xf32>,
    %245 = vector.broadcast %226 : vector<8x1xf32> to vector<8x8xf32>
    %246 = arith.cmpf oeq, %218, %245 : vector<8x8xf32>
    %c8_i32 = arith.constant 8 : i32
    %247 = vector.broadcast %c8_i32 : i32 to vector<8x8xi32>
    %248 = arith.select %246, %219, %247 : vector<8x8xi1>, vector<8x8xi32>
    %cst_67 = arith.constant dense<2147483647> : vector<8xi32>
    %249 = vector.multi_reduction <minsi>, %248, %cst_67 [1] : vector<8x8xi32> to vector<8xi32>
    %250 = vector.shape_cast %249 : vector<8xi32> to vector<8x1xi32>
    %c0_68 = arith.constant 0 : index
    %c0_69 = arith.constant 0 : index
    %251 = vector.load %arg13[%c0_68, %c0_69] : memref<8x1xi32, #tpu.memory_space<vmem>>, vector<8x1xi32>
    tpu.vector_store %arg13[%c0_68, %c0_69], %250 {strides = array<i32>} : memref<8x1xi32, #tpu.memory_space<vmem>>, vector<8x1xi32>,
    return
  }
}

</mosaic_0001>

<llo_original>
// kernel: _prover_call.1
$region0: #{_prover_call.1}
  #allocation0 [shape = 'u32[]', space=smem, size = 0x4, offset = 0x4, fixed_abs, tag = 'smem constant byte address 0x4 - core index']
  #allocation1 [shape = 'u32[144,128]{1,0:T(1,128)}', space=vmem, size = 0x12000, scoped, tag = 'internal scratch']
  %s0 = inlined_call_operand.vmem [shape: s32[8,8], index: 0, kind: input, shape index: {}]
  %s1 = inlined_call_operand.vmem [shape: s32[8,8], index: 1, kind: input, shape index: {}]
  %s2 = inlined_call_operand.vmem [shape: s32[8,8], index: 2, kind: input, shape index: {}]
  %s3 = inlined_call_operand.vmem [shape: s32[8,1], index: 3, kind: input, shape index: {}]
  %s4 = inlined_call_operand.vmem [shape: s32[8,1], index: 4, kind: input, shape index: {}]
  %s5 = inlined_call_operand.vmem [shape: s32[8,1], index: 5, kind: input, shape index: {}]
  %s6 = inlined_call_operand.vmem [shape: s32[8,1], index: 6, kind: input, shape index: {}]
  %s7 = inlined_call_operand.vmem [shape: s32[8,1], index: 7, kind: input, shape index: {}]
  %s8 = inlined_call_operand.vmem [shape: f32[3,16,32], index: 8, kind: input, shape index: {}]
  %s9 = inlined_call_operand.vmem [shape: f32[3,32,32], index: 9, kind: input, shape index: {}]
  %s10 = inlined_call_operand.vmem [shape: f32[3,1,32], index: 10, kind: input, shape index: {}]
  %s11 = inlined_call_operand.vmem [shape: f32[96,8], index: 11, kind: input, shape index: {}]
  %s12 = inlined_call_operand.vmem [shape: f32[1,8], index: 12, kind: input, shape index: {}]
  %s13 = inlined_call_operand.vmem [shape: s32[8,1], index: 13, kind: output, shape index: {0}]
  %s14 = inlined_call_operand.hbm [shape: f32[1,1], index: 14, kind: output, shape index: {1}]
  %15 = xla_tuple %s13, %s14
  %s16 = sld [smem:[#allocation0]]
  $region70: #{_prover_call.1} parent=0
    _
  %s18 = ssub.s32 1, %s16
  %s19 = scalar_select 0, %s18, %s16
  $region1: #{_prover_call.1} parent=0
    #allocation2 [shape = 'u8[512]{0}', space=vmem, size = 0x400, scoped, tag = 'output window, operand 1, single buffered']
    #allocation3 [shape = 's32[1]{0}', space=sflag, size = 0x4, scoped, tag = 'scoped memory for _prover_call.1']
    %20 = vsyncpa [#allocation3], 0
    // Predicated region
    $region2: #{_prover_call.1} parent=1 // pred_check
      _
    $region3: #{_prover_call.1} parent=1 // pred_check_branch
      %22 = sbr.rel (0) target = $region5
    $region4: #{_prover_call.1} parent=1 // pred_region
      _
    $region5: #{_prover_call.1} parent=1 // pred_fallthru
      _
    // Predicated region
    $region6: #{_prover_call.1} parent=1 // pred_check
      _
    $region7: #{_prover_call.1} parent=1 // pred_check_branch
      %24 = sbr.rel (0) target = $region9
    $region8: #{_prover_call.1} parent=1 // pred_region
      _
    $region9: #{_prover_call.1} parent=1 // pred_fallthru
      _
    // Predicated region
    $region10: #{_prover_call.1} parent=1 // pred_check
      _
    $region11: #{_prover_call.1} parent=1 // pred_check_branch
      %26 = sbr.rel (0) target = $region13
    $region12: #{_prover_call.1} parent=1 // pred_region
      _
    $region13: #{_prover_call.1} parent=1 // pred_fallthru
      _
    // Predicated region
    $region14: #{_prover_call.1} parent=1 // pred_check
      _
    $region15: #{_prover_call.1} parent=1 // pred_check_branch
      %28 = sbr.rel (0) target = $region17
    $region16: #{_prover_call.1} parent=1 // pred_region
      _
    $region17: #{_prover_call.1} parent=1 // pred_fallthru
      _
    // Predicated region
    $region18: #{_prover_call.1} parent=1 // pred_check
      _
    $region19: #{_prover_call.1} parent=1 // pred_check_branch
      %30 = sbr.rel (0) target = $region21
    $region20: #{_prover_call.1} parent=1 // pred_region
      _
    $region21: #{_prover_call.1} parent=1 // pred_fallthru
      _
    // Predicated region
    $region22: #{_prover_call.1} parent=1 // pred_check
      _
    $region23: #{_prover_call.1} parent=1 // pred_check_branch
      %32 = sbr.rel (0) target = $region25
    $region24: #{_prover_call.1} parent=1 // pred_region
      _
    $region25: #{_prover_call.1} parent=1 // pred_fallthru
      _
    // Predicated region
    $region26: #{_prover_call.1} parent=1 // pred_check
      _
    $region27: #{_prover_call.1} parent=1 // pred_check_branch
      %34 = sbr.rel (0) target = $region29
    $region28: #{_prover_call.1} parent=1 // pred_region
      _
    $region29: #{_prover_call.1} parent=1 // pred_fallthru
      _
    // Predicated region
    $region30: #{_prover_call.1} parent=1 // pred_check
      _
    $region31: #{_prover_call.1} parent=1 // pred_check_branch
      %36 = sbr.rel (0) target = $region33
    $region32: #{_prover_call.1} parent=1 // pred_region
      _
    $region33: #{_prover_call.1} parent=1 // pred_fallthru
      _
    // Predicated region
    $region34: #{_prover_call.1} parent=1 // pred_check
      _
    $region35: #{_prover_call.1} parent=1 // pred_check_branch
      %38 = sbr.rel (0) target = $region37
    $region36: #{_prover_call.1} parent=1 // pred_region
      _
    $region37: #{_prover_call.1} parent=1 // pred_fallthru
      _
    // Predicated region
    $region38: #{_prover_call.1} parent=1 // pred_check
      _
    $region39: #{_prover_call.1} parent=1 // pred_check_branch
      %40 = sbr.rel (0) target = $region41
    $region40: #{_prover_call.1} parent=1 // pred_region
      _
    $region41: #{_prover_call.1} parent=1 // pred_fallthru
      _
    // Predicated region
    $region42: #{_prover_call.1} parent=1 // pred_check
      _
    $region43: #{_prover_call.1} parent=1 // pred_check_branch
      %42 = sbr.rel (0) target = $region45
    $region44: #{_prover_call.1} parent=1 // pred_region
      _
    $region45: #{_prover_call.1} parent=1 // pred_fallthru
      _
    // Predicated region
    $region46: #{_prover_call.1} parent=1 // pred_check
      _
    $region47: #{_prover_call.1} parent=1 // pred_check_branch
      %44 = sbr.rel (0) target = $region49
    $region48: #{_prover_call.1} parent=1 // pred_region
      _
    $region49: #{_prover_call.1} parent=1 // pred_fallthru
      _
    // Predicated region
    $region50: #{_prover_call.1} parent=1 // pred_check
      _
    $region51: #{_prover_call.1} parent=1 // pred_check_branch
      %46 = sbr.rel (0) target = $region53
    $region52: #{_prover_call.1} parent=1 // pred_region
      _
    $region53: #{_prover_call.1} parent=1 // pred_fallthru
      _
    %v47 = vld [vmem:[%s0] sm:$0xff]
    %v48 = vlaneseq
    %v49 = vand.u32 %v48, 127
    %50 = vset.pattern.permute.xlu0 0
    %51 = vperm.xlu0 %50, %v47
    %v52 = vpop.permute.xlu0 %51
    %vm53 = vcmp.eq.s32.totalorder %v52, %v49
    %v54 = vsel %vm53, 1, 0
    %v55 = vcvt.s32.f32 %v54
    %v56 = vadd.f32 %v55, 0.0
    %57 = vset.pattern.permute.xlu0 1
    %58 = vperm.xlu0 %57, %v47
    %v59 = vpop.permute.xlu0 %58
    %vm60 = vcmp.eq.s32.totalorder %v59, %v49
    %v61 = vsel %vm60, 1, 0
    %v62 = vcvt.s32.f32 %v61
    %v63 = vadd.f32 %v56, %v62
    %64 = vset.pattern.permute.xlu0 2
    %65 = vperm.xlu0 %64, %v47
    %v66 = vpop.permute.xlu0 %65
    %vm67 = vcmp.eq.s32.totalorder %v66, %v49
    %v68 = vsel %vm67, 1, 0
    %v69 = vcvt.s32.f32 %v68
    %v70 = vadd.f32 %v63, %v69
    %71 = vset.pattern.permute.xlu0 3
    %72 = vperm.xlu0 %71, %v47
    %v73 = vpop.permute.xlu0 %72
    %vm74 = vcmp.eq.s32.totalorder %v73, %v49
    %v75 = vsel %vm74, 1, 0
    %v76 = vcvt.s32.f32 %v75
    %v77 = vadd.f32 %v70, %v76
    %78 = vset.pattern.permute.xlu0 4
    %79 = vperm.xlu0 %78, %v47
    %v80 = vpop.permute.xlu0 %79
    %vm81 = vcmp.eq.s32.totalorder %v80, %v49
    %v82 = vsel %vm81, 1, 0
    %v83 = vcvt.s32.f32 %v82
    %v84 = vadd.f32 %v77, %v83
    %85 = vset.pattern.permute.xlu0 5
    %86 = vperm.xlu0 %85, %v47
    %v87 = vpop.permute.xlu0 %86
    %vm88 = vcmp.eq.s32.totalorder %v87, %v49
    %v89 = vsel %vm88, 1, 0
    %v90 = vcvt.s32.f32 %v89
    %v91 = vadd.f32 %v84, %v90
    %92 = vset.pattern.permute.xlu0 6
    %93 = vperm.xlu0 %92, %v47
    %v94 = vpop.permute.xlu0 %93
    %vm95 = vcmp.eq.s32.totalorder %v94, %v49
    %v96 = vsel %vm95, 1, 0
    %v97 = vcvt.s32.f32 %v96
    %v98 = vadd.f32 %v91, %v97
    %99 = vset.pattern.permute.xlu0 7
    %100 = vperm.xlu0 %99, %v47
    %v101 = vpop.permute.xlu0 %100
    %vm102 = vcmp.eq.s32.totalorder %v101, %v49
    %v103 = vsel %vm102, 1, 0
    %v104 = vcvt.s32.f32 %v103
    %v105 = vadd.f32 %v98, %v104
    %v106 = vld [vmem:[%s8] sm:$0xff]
    %v107 = vld [vmem:[%s8 + $0x8] sm:$0xff]
    %vm108 = vcmask 130048
    %v110 = vsel %vm108, %v105, 0
    %112 = vmatprep.subr.mxu0 0.0
    %113 = vmatpush1.msra.mxu0 %v106
    %114 = vmatprep.subr.mxu0 0.0
    %115 = vmatpush1.msra.mxu0 %v107
    %116 = vmatprep.subr.mxu0 0.0
    %117 = vmatpush1.msra.mxu0 0.0
    %118 = vmatprep.subr.mxu0 0.0
    %119 = vmatpush1.msra.mxu0 0.0
    %120 = vmatprep.subr.mxu0 0.0
    %121 = vmatpush1.msra.mxu0 0.0
    %122 = vmatprep.subr.mxu0 0.0
    %123 = vmatpush1.msra.mxu0 0.0
    %124 = vmatprep.subr.mxu0 0.0
    %125 = vmatpush1.msra.mxu0 0.0
    %126 = vmatprep.subr.mxu0 0.0
    %127 = vmatpush1.msra.mxu0 0.0
    %128 = vmatprep.subr.mxu0 0.0
    %129 = vmatpush1.msra.mxu0 0.0
    %130 = vmatprep.subr.mxu0 0.0
    %131 = vmatpush1.msra.mxu0 0.0
    %132 = vmatprep.subr.mxu0 0.0
    %133 = vmatpush1.msra.mxu0 0.0
    %134 = vmatprep.subr.mxu0 0.0
    %135 = vmatpush1.msra.mxu0 0.0
    %136 = vmatprep.subr.mxu0 0.0
    %137 = vmatpush1.msra.mxu0 0.0
    %138 = vmatprep.subr.mxu0 0.0
    %139 = vmatpush1.msra.mxu0 0.0
    %140 = vmatprep.subr.mxu0 0.0
    %141 = vmatpush1.msra.mxu0 0.0
    %142 = vmatprep.subr.mxu0 0.0
    %143 = vmatpush1.msra.mxu0 0.0
    %144 = vmatprep.subr.mxu0 0.0
    %145 = vmatpush1.msra.mxu0 0.0
    %146 = vmatprep.subr.mxu0 0.0
    %147 = vmatpush1.msra.mxu0 0.0
    %148 = vmatprep.subr.mxu0 0.0
    %149 = vmatpush1.msra.mxu0 0.0
    %150 = vmatprep.subr.mxu0 0.0
    %151 = vmatpush1.msra.mxu0 0.0
    %152 = vmatprep.subr.mxu0 0.0
    %153 = vmatpush1.msra.mxu0 0.0
    %154 = vmatprep.subr.mxu0 0.0
    %155 = vmatpush1.msra.mxu0 0.0
    %156 = vmatprep.subr.mxu0 0.0
    %157 = vmatpush1.msra.mxu0 0.0
    %158 = vmatprep.subr.mxu0 0.0
    %159 = vmatpush1.msra.mxu0 0.0
    %160 = vmatprep.subr.mxu0 0.0
    %161 = vmatpush1.msra.mxu0 0.0
    %162 = vmatprep.subr.mxu0 0.0
    %163 = vmatpush1.msra.mxu0 0.0
    %164 = vmatprep.subr.mxu0 0.0
    %165 = vmatpush1.msra.mxu0 0.0
    %166 = vmatprep.subr.mxu0 0.0
    %167 = vmatpush1.msra.mxu0 0.0
    %168 = vmatprep.subr.mxu0 0.0
    %169 = vmatpush1.msra.mxu0 0.0
    %170 = vmatprep.subr.mxu0 0.0
    %171 = vmatpush1.msra.mxu0 0.0
    %172 = vmatprep.subr.mxu0 0.0
    %173 = vmatpush1.msra.mxu0 0.0
    %174 = vmatprep.subr.mxu0 0.0
    %175 = vmatpush1.msra.mxu0 0.0
    %176 = vmatprep.mubr.f32.mxu0 0.0
    %177 = vmatmul.mubr.f32.gmra.mrb[0].mxu0 %v110
    %v178 = vpop.f32.mrb[0].mxu0
    %v179 = vadd.f32 0.0, %v178
    %v180 = vpop.f32.mrb[0].mxu0
    %181 = vdwg.mxu0
    %v182 = vld [vmem:[%s9] sm:$0xff]
    %v183 = vld [vmem:[%s9 + $0x8] sm:$0xff]
    %v184 = vld [vmem:[%s9 + $0x10] sm:$0xff]
    %v185 = vld [vmem:[%s9 + $0x18] sm:$0xff]
    %v186 = vld [vmem:[%s10] sm:$0x1]
    %v188 = vlaneseq
    %v189 = vshrl.u32 %v188, 7
    %v190 = vsub.s32 0, %v189
    %v191 = vrot.slane %v186, %v190
    %vm193 = vcmask 261120
    %v195 = vsel %vm193, %v179, 0
    %197 = vmatprep.subr.mxu0 0.0
    %198 = vmatpush1.msra.mxu0 %v182
    %199 = vmatprep.subr.mxu0 0.0
    %200 = vmatpush1.msra.mxu0 %v183
    %201 = vmatprep.subr.mxu0 0.0
    %202 = vmatpush1.msra.mxu0 %v184
    %203 = vmatprep.subr.mxu0 0.0
    %204 = vmatpush1.msra.mxu0 %v185
    %205 = vmatprep.subr.mxu0 0.0
    %206 = vmatpush1.msra.mxu0 0.0
    %207 = vmatprep.subr.mxu0 0.0
    %208 = vmatpush1.msra.mxu0 0.0
    %209 = vmatprep.subr.mxu0 0.0
    %210 = vmatpush1.msra.mxu0 0.0
    %211 = vmatprep.subr.mxu0 0.0
    %212 = vmatpush1.msra.mxu0 0.0
    %213 = vmatprep.subr.mxu0 0.0
    %214 = vmatpush1.msra.mxu0 0.0
    %215 = vmatprep.subr.mxu0 0.0
    %216 = vmatpush1.msra.mxu0 0.0
    %217 = vmatprep.subr.mxu0 0.0
    %218 = vmatpush1.msra.mxu0 0.0
    %219 = vmatprep.subr.mxu0 0.0
    %220 = vmatpush1.msra.mxu0 0.0
    %221 = vmatprep.subr.mxu0 0.0
    %222 = vmatpush1.msra.mxu0 0.0
    %223 = vmatprep.subr.mxu0 0.0
    %224 = vmatpush1.msra.mxu0 0.0
    %225 = vmatprep.subr.mxu0 0.0
    %226 = vmatpush1.msra.mxu0 0.0
    %227 = vmatprep.subr.mxu0 0.0
    %228 = vmatpush1.msra.mxu0 0.0
    %229 = vmatprep.subr.mxu0 0.0
    %230 = vmatpush1.msra.mxu0 0.0
    %231 = vmatprep.subr.mxu0 0.0
    %232 = vmatpush1.msra.mxu0 0.0
    %233 = vmatprep.subr.mxu0 0.0
    %234 = vmatpush1.msra.mxu0 0.0
    %235 = vmatprep.subr.mxu0 0.0
    %236 = vmatpush1.msra.mxu0 0.0
    %237 = vmatprep.subr.mxu0 0.0
    %238 = vmatpush1.msra.mxu0 0.0
    %239 = vmatprep.subr.mxu0 0.0
    %240 = vmatpush1.msra.mxu0 0.0
    %241 = vmatprep.subr.mxu0 0.0
    %242 = vmatpush1.msra.mxu0 0.0
    %243 = vmatprep.subr.mxu0 0.0
    %244 = vmatpush1.msra.mxu0 0.0
    %245 = vmatprep.subr.mxu0 0.0
    %246 = vmatpush1.msra.mxu0 0.0
    %247 = vmatprep.subr.mxu0 0.0
    %248 = vmatpush1.msra.mxu0 0.0
    %249 = vmatprep.subr.mxu0 0.0
    %250 = vmatpush1.msra.mxu0 0.0
    %251 = vmatprep.subr.mxu0 0.0
    %252 = vmatpush1.msra.mxu0 0.0
    %253 = vmatprep.subr.mxu0 0.0
    %254 = vmatpush1.msra.mxu0 0.0
    %255 = vmatprep.subr.mxu0 0.0
    %256 = vmatpush1.msra.mxu0 0.0
    %257 = vmatprep.subr.mxu0 0.0
    %258 = vmatpush1.msra.mxu0 0.0
    %259 = vmatprep.subr.mxu0 0.0
    %260 = vmatpush1.msra.mxu0 0.0
    %261 = vmatprep.mubr.f32.mxu0 0.0
    %262 = vmatmul.mubr.f32.gmra.mrb[0].mxu0 %v195
    %v263 = vpop.f32.mrb[0].mxu0
    %v264 = vadd.f32 %v191, %v263
    %v265 = vpop.f32.mrb[0].mxu0
    %266 = vdwg.mxu0
    %v267 = vtanh.pop %v264
    %v268 = vld [vmem:[%s1] sm:$0xff]
    %269 = vset.pattern.permute.xlu0 0
    %270 = vperm.xlu0 %269, %v268
    %v271 = vpop.permute.xlu0 %270
    %vm272 = vcmp.eq.s32.totalorder %v271, %v49
    %v273 = vsel %vm272, 1, 0
    %v274 = vcvt.s32.f32 %v273
    %v275 = vadd.f32 %v274, 0.0
    %276 = vset.pattern.permute.xlu0 1
    %277 = vperm.xlu0 %276, %v268
    %v278 = vpop.permute.xlu0 %277
    %vm279 = vcmp.eq.s32.totalorder %v278, %v49
    %v280 = vsel %vm279, 1, 0
    %v281 = vcvt.s32.f32 %v280
    %v282 = vadd.f32 %v275, %v281
    %283 = vset.pattern.permute.xlu0 2
    %284 = vperm.xlu0 %283, %v268
    %v285 = vpop.permute.xlu0 %284
    %vm286 = vcmp.eq.s32.totalorder %v285, %v49
    %v287 = vsel %vm286, 1, 0
    %v288 = vcvt.s32.f32 %v287
    %v289 = vadd.f32 %v282, %v288
    %290 = vset.pattern.permute.xlu0 3
    %291 = vperm.xlu0 %290, %v268
    %v292 = vpop.permute.xlu0 %291
    %vm293 = vcmp.eq.s32.totalorder %v292, %v49
    %v294 = vsel %vm293, 1, 0
    %v295 = vcvt.s32.f32 %v294
    %v296 = vadd.f32 %v289, %v295
    %297 = vset.pattern.permute.xlu0 4
    %298 = vperm.xlu0 %297, %v268
    %v299 = vpop.permute.xlu0 %298
    %vm300 = vcmp.eq.s32.totalorder %v299, %v49
    %v301 = vsel %vm300, 1, 0
    %v302 = vcvt.s32.f32 %v301
    %v303 = vadd.f32 %v296, %v302
    %304 = vset.pattern.permute.xlu0 5
    %305 = vperm.xlu0 %304, %v268
    %v306 = vpop.permute.xlu0 %305
    %vm307 = vcmp.eq.s32.totalorder %v306, %v49
    %v308 = vsel %vm307, 1, 0
    %v309 = vcvt.s32.f32 %v308
    %v310 = vadd.f32 %v303, %v309
    %311 = vset.pattern.permute.xlu0 6
    %312 = vperm.xlu0 %311, %v268
    %v313 = vpop.permute.xlu0 %312
    %vm314 = vcmp.eq.s32.totalorder %v313, %v49
    %v315 = vsel %vm314, 1, 0
    %v316 = vcvt.s32.f32 %v315
    %v317 = vadd.f32 %v310, %v316
    %318 = vset.pattern.permute.xlu0 7
    %319 = vperm.xlu0 %318, %v268
    %v320 = vpop.permute.xlu0 %319
    %vm321 = vcmp.eq.s32.totalorder %v320, %v49
    %v322 = vsel %vm321, 1, 0
    %v323 = vcvt.s32.f32 %v322
    %v324 = vadd.f32 %v317, %v323
    %s325 = scalar_lea.vmem %s8, 16
    %v326 = vld [vmem:[%s325] sm:$0xff]
    %v327 = vld [vmem:[%s325 + $0x8] sm:$0xff]
    %v329 = vsel %vm108, %v324, 0
    %331 = vmatprep.subr.mxu0 0.0
    %332 = vmatpush1.msra.mxu0 %v326
    %333 = vmatprep.subr.mxu0 0.0
    %334 = vmatpush1.msra.mxu0 %v327
    %335 = vmatprep.subr.mxu0 0.0
    %336 = vmatpush1.msra.mxu0 0.0
    %337 = vmatprep.subr.mxu0 0.0
    %338 = vmatpush1.msra.mxu0 0.0
    %339 = vmatprep.subr.mxu0 0.0
    %340 = vmatpush1.msra.mxu0 0.0
    %341 = vmatprep.subr.mxu0 0.0
    %342 = vmatpush1.msra.mxu0 0.0
    %343 = vmatprep.subr.mxu0 0.0
    %344 = vmatpush1.msra.mxu0 0.0
    %345 = vmatprep.subr.mxu0 0.0
    %346 = vmatpush1.msra.mxu0 0.0
    %347 = vmatprep.subr.mxu0 0.0
    %348 = vmatpush1.msra.mxu0 0.0
    %349 = vmatprep.subr.mxu0 0.0
    %350 = vmatpush1.msra.mxu0 0.0
    %351 = vmatprep.subr.mxu0 0.0
    %352 = vmatpush1.msra.mxu0 0.0
    %353 = vmatprep.subr.mxu0 0.0
    %354 = vmatpush1.msra.mxu0 0.0
    %355 = vmatprep.subr.mxu0 0.0
    %356 = vmatpush1.msra.mxu0 0.0
    %357 = vmatprep.subr.mxu0 0.0
    %358 = vmatpush1.msra.mxu0 0.0
    %359 = vmatprep.subr.mxu0 0.0
    %360 = vmatpush1.msra.mxu0 0.0
    %361 = vmatprep.subr.mxu0 0.0
    %362 = vmatpush1.msra.mxu0 0.0
    %363 = vmatprep.subr.mxu0 0.0
    %364 = vmatpush1.msra.mxu0 0.0
    %365 = vmatprep.subr.mxu0 0.0
    %366 = vmatpush1.msra.mxu0 0.0
    %367 = vmatprep.subr.mxu0 0.0
    %368 = vmatpush1.msra.mxu0 0.0
    %369 = vmatprep.subr.mxu0 0.0
    %370 = vmatpush1.msra.mxu0 0.0
    %371 = vmatprep.subr.mxu0 0.0
    %372 = vmatpush1.msra.mxu0 0.0
    %373 = vmatprep.subr.mxu0 0.0
    %374 = vmatpush1.msra.mxu0 0.0
    %375 = vmatprep.subr.mxu0 0.0
    %376 = vmatpush1.msra.mxu0 0.0
    %377 = vmatprep.subr.mxu0 0.0
    %378 = vmatpush1.msra.mxu0 0.0
    %379 = vmatprep.subr.mxu0 0.0
    %380 = vmatpush1.msra.mxu0 0.0
    %381 = vmatprep.subr.mxu0 0.0
    %382 = vmatpush1.msra.mxu0 0.0
    %383 = vmatprep.subr.mxu0 0.0
    %384 = vmatpush1.msra.mxu0 0.0
    %385 = vmatprep.subr.mxu0 0.0
    %386 = vmatpush1.msra.mxu0 0.0
    %387 = vmatprep.subr.mxu0 0.0
    %388 = vmatpush1.msra.mxu0 0.0
    %389 = vmatprep.subr.mxu0 0.0
    %390 = vmatpush1.msra.mxu0 0.0
    %391 = vmatprep.subr.mxu0 0.0
    %392 = vmatpush1.msra.mxu0 0.0
    %393 = vmatprep.subr.mxu0 0.0
    %394 = vmatpush1.msra.mxu0 0.0
    %395 = vmatprep.mubr.f32.mxu0 0.0
    %396 = vmatmul.mubr.f32.gmra.mrb[0].mxu0 %v329
    %v397 = vpop.f32.mrb[0].mxu0
    %v398 = vadd.f32 0.0, %v397
    %v399 = vpop.f32.mrb[0].mxu0
    %400 = vdwg.mxu0
    %s401 = scalar_lea.vmem %s9, 32
    %v402 = vld [vmem:[%s401] sm:$0xff]
    %v403 = vld [vmem:[%s401 + $0x8] sm:$0xff]
    %v404 = vld [vmem:[%s401 + $0x10] sm:$0xff]
    %v405 = vld [vmem:[%s401 + $0x18] sm:$0xff]
    %s406 = scalar_lea.vmem %s10, 1
    %v407 = vld [vmem:[%s406] sm:$0x1]
    %v409 = vlaneseq
    %v410 = vshrl.u32 %v409, 7
    %v411 = vsub.s32 0, %v410
    %v412 = vrot.slane %v407, %v411
    %v415 = vsel %vm193, %v398, 0
    %417 = vmatprep.subr.mxu0 0.0
    %418 = vmatpush1.msra.mxu0 %v402
    %419 = vmatprep.subr.mxu0 0.0
    %420 = vmatpush1.msra.mxu0 %v403
    %421 = vmatprep.subr.mxu0 0.0
    %422 = vmatpush1.msra.mxu0 %v404
    %423 = vmatprep.subr.mxu0 0.0
    %424 = vmatpush1.msra.mxu0 %v405
    %425 = vmatprep.subr.mxu0 0.0
    %426 = vmatpush1.msra.mxu0 0.0
    %427 = vmatprep.subr.mxu0 0.0
    %428 = vmatpush1.msra.mxu0 0.0
    %429 = vmatprep.subr.mxu0 0.0
    %430 = vmatpush1.msra.mxu0 0.0
    %431 = vmatprep.subr.mxu0 0.0
    %432 = vmatpush1.msra.mxu0 0.0
    %433 = vmatprep.subr.mxu0 0.0
    %434 = vmatpush1.msra.mxu0 0.0
    %435 = vmatprep.subr.mxu0 0.0
    %436 = vmatpush1.msra.mxu0 0.0
    %437 = vmatprep.subr.mxu0 0.0
    %438 = vmatpush1.msra.mxu0 0.0
    %439 = vmatprep.subr.mxu0 0.0
    %440 = vmatpush1.msra.mxu0 0.0
    %441 = vmatprep.subr.mxu0 0.0
    %442 = vmatpush1.msra.mxu0 0.0
    %443 = vmatprep.subr.mxu0 0.0
    %444 = vmatpush1.msra.mxu0 0.0
    %445 = vmatprep.subr.mxu0 0.0
    %446 = vmatpush1.msra.mxu0 0.0
    %447 = vmatprep.subr.mxu0 0.0
    %448 = vmatpush1.msra.mxu0 0.0
    %449 = vmatprep.subr.mxu0 0.0
    %450 = vmatpush1.msra.mxu0 0.0
    %451 = vmatprep.subr.mxu0 0.0
    %452 = vmatpush1.msra.mxu0 0.0
    %453 = vmatprep.subr.mxu0 0.0
    %454 = vmatpush1.msra.mxu0 0.0
    %455 = vmatprep.subr.mxu0 0.0
    %456 = vmatpush1.msra.mxu0 0.0
    %457 = vmatprep.subr.mxu0 0.0
    %458 = vmatpush1.msra.mxu0 0.0
    %459 = vmatprep.subr.mxu0 0.0
    %460 = vmatpush1.msra.mxu0 0.0
    %461 = vmatprep.subr.mxu0 0.0
    %462 = vmatpush1.msra.mxu0 0.0
    %463 = vmatprep.subr.mxu0 0.0
    %464 = vmatpush1.msra.mxu0 0.0
    %465 = vmatprep.subr.mxu0 0.0
    %466 = vmatpush1.msra.mxu0 0.0
    %467 = vmatprep.subr.mxu0 0.0
    %468 = vmatpush1.msra.mxu0 0.0
    %469 = vmatprep.subr.mxu0 0.0
    %470 = vmatpush1.msra.mxu0 0.0
    %471 = vmatprep.subr.mxu0 0.0
    %472 = vmatpush1.msra.mxu0 0.0
    %473 = vmatprep.subr.mxu0 0.0
    %474 = vmatpush1.msra.mxu0 0.0
    %475 = vmatprep.subr.mxu0 0.0
    %476 = vmatpush1.msra.mxu0 0.0
    %477 = vmatprep.subr.mxu0 0.0
    %478 = vmatpush1.msra.mxu0 0.0
    %479 = vmatprep.subr.mxu0 0.0
    %480 = vmatpush1.msra.mxu0 0.0
    %481 = vmatprep.mubr.f32.mxu0 0.0
    %482 = vmatmul.mubr.f32.gmra.mrb[0].mxu0 %v415
    %v483 = vpop.f32.mrb[0].mxu0
    %v484 = vadd.f32 %v412, %v483
    %v485 = vpop.f32.mrb[0].mxu0
    %486 = vdwg.mxu0
    %v487 = vtanh.pop %v484
    %v488 = vld [vmem:[%s2] sm:$0xff]
    %489 = vset.pattern.permute.xlu0 0
    %490 = vperm.xlu0 %489, %v488
    %v491 = vpop.permute.xlu0 %490
    %vm492 = vcmp.eq.s32.totalorder %v491, %v49
    %v493 = vsel %vm492, 1, 0
    %v494 = vcvt.s32.f32 %v493
    %v495 = vadd.f32 %v494, 0.0
    %496 = vset.pattern.permute.xlu0 1
    %497 = vperm.xlu0 %496, %v488
    %v498 = vpop.permute.xlu0 %497
    %vm499 = vcmp.eq.s32.totalorder %v498, %v49
    %v500 = vsel %vm499, 1, 0
    %v501 = vcvt.s32.f32 %v500
    %v502 = vadd.f32 %v495, %v501
    %503 = vset.pattern.permute.xlu0 2
    %504 = vperm.xlu0 %503, %v488
    %v505 = vpop.permute.xlu0 %504
    %vm506 = vcmp.eq.s32.totalorder %v505, %v49
    %v507 = vsel %vm506, 1, 0
    %v508 = vcvt.s32.f32 %v507
    %v509 = vadd.f32 %v502, %v508
    %510 = vset.pattern.permute.xlu0 3
    %511 = vperm.xlu0 %510, %v488
    %v512 = vpop.permute.xlu0 %511
    %vm513 = vcmp.eq.s32.totalorder %v512, %v49
    %v514 = vsel %vm513, 1, 0
    %v515 = vcvt.s32.f32 %v514
    %v516 = vadd.f32 %v509, %v515
    %517 = vset.pattern.permute.xlu0 4
    %518 = vperm.xlu0 %517, %v488
    %v519 = vpop.permute.xlu0 %518
    %vm520 = vcmp.eq.s32.totalorder %v519, %v49
    %v521 = vsel %vm520, 1, 0
    %v522 = vcvt.s32.f32 %v521
    %v523 = vadd.f32 %v516, %v522
    %524 = vset.pattern.permute.xlu0 5
    %525 = vperm.xlu0 %524, %v488
    %v526 = vpop.permute.xlu0 %525
    %vm527 = vcmp.eq.s32.totalorder %v526, %v49
    %v528 = vsel %vm527, 1, 0
    %v529 = vcvt.s32.f32 %v528
    %v530 = vadd.f32 %v523, %v529
    %531 = vset.pattern.permute.xlu0 6
    %532 = vperm.xlu0 %531, %v488
    %v533 = vpop.permute.xlu0 %532
    %vm534 = vcmp.eq.s32.totalorder %v533, %v49
    %v535 = vsel %vm534, 1, 0
    %v536 = vcvt.s32.f32 %v535
    %v537 = vadd.f32 %v530, %v536
    %538 = vset.pattern.permute.xlu0 7
    %539 = vperm.xlu0 %538, %v488
    %v540 = vpop.permute.xlu0 %539
    %vm541 = vcmp.eq.s32.totalorder %v540, %v49
    %v542 = vsel %vm541, 1, 0
    %v543 = vcvt.s32.f32 %v542
    %v544 = vadd.f32 %v537, %v543
    %s545 = scalar_lea.vmem %s8, 32
    %v546 = vld [vmem:[%s545] sm:$0xff]
    %v547 = vld [vmem:[%s545 + $0x8] sm:$0xff]
    %v549 = vsel %vm108, %v544, 0
    %551 = vmatprep.subr.mxu0 0.0
    %552 = vmatpush1.msra.mxu0 %v546
    %553 = vmatprep.subr.mxu0 0.0
    %554 = vmatpush1.msra.mxu0 %v547
    %555 = vmatprep.subr.mxu0 0.0
    %556 = vmatpush1.msra.mxu0 0.0
    %557 = vmatprep.subr.mxu0 0.0
    %558 = vmatpush1.msra.mxu0 0.0
    %559 = vmatprep.subr.mxu0 0.0
    %560 = vmatpush1.msra.mxu0 0.0
    %561 = vmatprep.subr.mxu0 0.0
    %562 = vmatpush1.msra.mxu0 0.0
    %563 = vmatprep.subr.mxu0 0.0
    %564 = vmatpush1.msra.mxu0 0.0
    %565 = vmatprep.subr.mxu0 0.0
    %566 = vmatpush1.msra.mxu0 0.0
    %567 = vmatprep.subr.mxu0 0.0
    %568 = vmatpush1.msra.mxu0 0.0
    %569 = vmatprep.subr.mxu0 0.0
    %570 = vmatpush1.msra.mxu0 0.0
    %571 = vmatprep.subr.mxu0 0.0
    %572 = vmatpush1.msra.mxu0 0.0
    %573 = vmatprep.subr.mxu0 0.0
    %574 = vmatpush1.msra.mxu0 0.0
    %575 = vmatprep.subr.mxu0 0.0
    %576 = vmatpush1.msra.mxu0 0.0
    %577 = vmatprep.subr.mxu0 0.0
    %578 = vmatpush1.msra.mxu0 0.0
    %579 = vmatprep.subr.mxu0 0.0
    %580 = vmatpush1.msra.mxu0 0.0
    %581 = vmatprep.subr.mxu0 0.0
    %582 = vmatpush1.msra.mxu0 0.0
    %583 = vmatprep.subr.mxu0 0.0
    %584 = vmatpush1.msra.mxu0 0.0
    %585 = vmatprep.subr.mxu0 0.0
    %586 = vmatpush1.msra.mxu0 0.0
    %587 = vmatprep.subr.mxu0 0.0
    %588 = vmatpush1.msra.mxu0 0.0
    %589 = vmatprep.subr.mxu0 0.0
    %590 = vmatpush1.msra.mxu0 0.0
    %591 = vmatprep.subr.mxu0 0.0
    %592 = vmatpush1.msra.mxu0 0.0
    %593 = vmatprep.subr.mxu0 0.0
    %594 = vmatpush1.msra.mxu0 0.0
    %595 = vmatprep.subr.mxu0 0.0
    %596 = vmatpush1.msra.mxu0 0.0
    %597 = vmatprep.subr.mxu0 0.0
    %598 = vmatpush1.msra.mxu0 0.0
    %599 = vmatprep.subr.mxu0 0.0
    %600 = vmatpush1.msra.mxu0 0.0
    %601 = vmatprep.subr.mxu0 0.0
    %602 = vmatpush1.msra.mxu0 0.0
    %603 = vmatprep.subr.mxu0 0.0
    %604 = vmatpush1.msra.mxu0 0.0
    %605 = vmatprep.subr.mxu0 0.0
    %606 = vmatpush1.msra.mxu0 0.0
    %607 = vmatprep.subr.mxu0 0.0
    %608 = vmatpush1.msra.mxu0 0.0
    %609 = vmatprep.subr.mxu0 0.0
    %610 = vmatpush1.msra.mxu0 0.0
    %611 = vmatprep.subr.mxu0 0.0
    %612 = vmatpush1.msra.mxu0 0.0
    %613 = vmatprep.subr.mxu0 0.0
    %614 = vmatpush1.msra.mxu0 0.0
    %615 = vmatprep.mubr.f32.mxu0 0.0
    %616 = vmatmul.mubr.f32.gmra.mrb[0].mxu0 %v549
    %v617 = vpop.f32.mrb[0].mxu0
    %v618 = vadd.f32 0.0, %v617
    %v619 = vpop.f32.mrb[0].mxu0
    %620 = vdwg.mxu0
    %s621 = scalar_lea.vmem %s9, 64
    %v622 = vld [vmem:[%s621] sm:$0xff]
    %v623 = vld [vmem:[%s621 + $0x8] sm:$0xff]
    %v624 = vld [vmem:[%s621 + $0x10] sm:$0xff]
    %v625 = vld [vmem:[%s621 + $0x18] sm:$0xff]
    %s626 = scalar_lea.vmem %s10, 2
    %v627 = vld [vmem:[%s626] sm:$0x1]
    %v629 = vlaneseq
    %v630 = vshrl.u32 %v629, 7
    %v631 = vsub.s32 0, %v630
    %v632 = vrot.slane %v627, %v631
    %v635 = vsel %vm193, %v618, 0
    %637 = vmatprep.subr.mxu0 0.0
    %638 = vmatpush1.msra.mxu0 %v622
    %639 = vmatprep.subr.mxu0 0.0
    %640 = vmatpush1.msra.mxu0 %v623
    %641 = vmatprep.subr.mxu0 0.0
    %642 = vmatpush1.msra.mxu0 %v624
    %643 = vmatprep.subr.mxu0 0.0
    %644 = vmatpush1.msra.mxu0 %v625
    %645 = vmatprep.subr.mxu0 0.0
    %646 = vmatpush1.msra.mxu0 0.0
    %647 = vmatprep.subr.mxu0 0.0
    %648 = vmatpush1.msra.mxu0 0.0
    %649 = vmatprep.subr.mxu0 0.0
    %650 = vmatpush1.msra.mxu0 0.0
    %651 = vmatprep.subr.mxu0 0.0
    %652 = vmatpush1.msra.mxu0 0.0
    %653 = vmatprep.subr.mxu0 0.0
    %654 = vmatpush1.msra.mxu0 0.0
    %655 = vmatprep.subr.mxu0 0.0
    %656 = vmatpush1.msra.mxu0 0.0
    %657 = vmatprep.subr.mxu0 0.0
    %658 = vmatpush1.msra.mxu0 0.0
    %659 = vmatprep.subr.mxu0 0.0
    %660 = vmatpush1.msra.mxu0 0.0
    %661 = vmatprep.subr.mxu0 0.0
    %662 = vmatpush1.msra.mxu0 0.0
    %663 = vmatprep.subr.mxu0 0.0
    %664 = vmatpush1.msra.mxu0 0.0
    %665 = vmatprep.subr.mxu0 0.0
    %666 = vmatpush1.msra.mxu0 0.0
    %667 = vmatprep.subr.mxu0 0.0
    %668 = vmatpush1.msra.mxu0 0.0
    %669 = vmatprep.subr.mxu0 0.0
    %670 = vmatpush1.msra.mxu0 0.0
    %671 = vmatprep.subr.mxu0 0.0
    %672 = vmatpush1.msra.mxu0 0.0
    %673 = vmatprep.subr.mxu0 0.0
    %674 = vmatpush1.msra.mxu0 0.0
    %675 = vmatprep.subr.mxu0 0.0
    %676 = vmatpush1.msra.mxu0 0.0
    %677 = vmatprep.subr.mxu0 0.0
    %678 = vmatpush1.msra.mxu0 0.0
    %679 = vmatprep.subr.mxu0 0.0
    %680 = vmatpush1.msra.mxu0 0.0
    %681 = vmatprep.subr.mxu0 0.0
    %682 = vmatpush1.msra.mxu0 0.0
    %683 = vmatprep.subr.mxu0 0.0
    %684 = vmatpush1.msra.mxu0 0.0
    %685 = vmatprep.subr.mxu0 0.0
    %686 = vmatpush1.msra.mxu0 0.0
    %687 = vmatprep.subr.mxu0 0.0
    %688 = vmatpush1.msra.mxu0 0.0
    %689 = vmatprep.subr.mxu0 0.0
    %690 = vmatpush1.msra.mxu0 0.0
    %691 = vmatprep.subr.mxu0 0.0
    %692 = vmatpush1.msra.mxu0 0.0
    %693 = vmatprep.subr.mxu0 0.0
    %694 = vmatpush1.msra.mxu0 0.0
    %695 = vmatprep.subr.mxu0 0.0
    %696 = vmatpush1.msra.mxu0 0.0
    %697 = vmatprep.subr.mxu0 0.0
    %698 = vmatpush1.msra.mxu0 0.0
    %699 = vmatprep.subr.mxu0 0.0
    %700 = vmatpush1.msra.mxu0 0.0
    %701 = vmatprep.mubr.f32.mxu0 0.0
    %702 = vmatmul.mubr.f32.gmra.mrb[0].mxu0 %v635
    %v703 = vpop.f32.mrb[0].mxu0
    %v704 = vadd.f32 %v632, %v703
    %v705 = vpop.f32.mrb[0].mxu0
    %706 = vdwg.mxu0
    %v707 = vtanh.pop %v704
    %v708 = vld [vmem:[%s3] sm:$0xff]
    %709 = vset.pattern.permute.xlu0 0
    %710 = vperm.xlu0 %709, %v708
    %v711 = vpop.permute.xlu0 %710
    %vm712 = vcmp.ge.s32.totalorder %v49, %v711
    %v713 = vld [vmem:[%s4] sm:$0xff]
    %714 = vset.pattern.permute.xlu0 0
    %715 = vperm.xlu0 %714, %v713
    %v716 = vpop.permute.xlu0 %715
    %vm717 = vcmp.lt.s32.totalorder %v49, %v716
    %vm718 = vmand %vm712, %vm717
    %v719 = vsel %vm718, 1, 0
    %v720 = vcvt.s32.f32 %v719
    %vm721 = vcmask 64512
    %v723 = vsel %vm721, %v720, 0
    %725 = vmatprep.subr.mxu0 0.0
    %726 = vmatpush1.msra.mxu0 %v487
    %727 = vmatprep.subr.mxu0 0.0
    %728 = vmatpush1.msra.mxu0 0.0
    %729 = vmatprep.subr.mxu0 0.0
    %730 = vmatpush1.msra.mxu0 0.0
    %731 = vmatprep.subr.mxu0 0.0
    %732 = vmatpush1.msra.mxu0 0.0
    %733 = vmatprep.subr.mxu0 0.0
    %734 = vmatpush1.msra.mxu0 0.0
    %735 = vmatprep.subr.mxu0 0.0
    %736 = vmatpush1.msra.mxu0 0.0
    %737 = vmatprep.subr.mxu0 0.0
    %738 = vmatpush1.msra.mxu0 0.0
    %739 = vmatprep.subr.mxu0 0.0
    %740 = vmatpush1.msra.mxu0 0.0
    %741 = vmatprep.subr.mxu0 0.0
    %742 = vmatpush1.msra.mxu0 0.0
    %743 = vmatprep.subr.mxu0 0.0
    %744 = vmatpush1.msra.mxu0 0.0
    %745 = vmatprep.subr.mxu0 0.0
    %746 = vmatpush1.msra.mxu0 0.0
    %747 = vmatprep.subr.mxu0 0.0
    %748 = vmatpush1.msra.mxu0 0.0
    %749 = vmatprep.subr.mxu0 0.0
    %750 = vmatpush1.msra.mxu0 0.0
    %751 = vmatprep.subr.mxu0 0.0
    %752 = vmatpush1.msra.mxu0 0.0
    %753 = vmatprep.subr.mxu0 0.0
    %754 = vmatpush1.msra.mxu0 0.0
    %755 = vmatprep.subr.mxu0 0.0
    %756 = vmatpush1.msra.mxu0 0.0
    %757 = vmatprep.subr.mxu0 0.0
    %758 = vmatpush1.msra.mxu0 0.0
    %759 = vmatprep.subr.mxu0 0.0
    %760 = vmatpush1.msra.mxu0 0.0
    %761 = vmatprep.subr.mxu0 0.0
    %762 = vmatpush1.msra.mxu0 0.0
    %763 = vmatprep.subr.mxu0 0.0
    %764 = vmatpush1.msra.mxu0 0.0
    %765 = vmatprep.subr.mxu0 0.0
    %766 = vmatpush1.msra.mxu0 0.0
    %767 = vmatprep.subr.mxu0 0.0
    %768 = vmatpush1.msra.mxu0 0.0
    %769 = vmatprep.subr.mxu0 0.0
    %770 = vmatpush1.msra.mxu0 0.0
    %771 = vmatprep.subr.mxu0 0.0
    %772 = vmatpush1.msra.mxu0 0.0
    %773 = vmatprep.subr.mxu0 0.0
    %774 = vmatpush1.msra.mxu0 0.0
    %775 = vmatprep.subr.mxu0 0.0
    %776 = vmatpush1.msra.mxu0 0.0
    %777 = vmatprep.subr.mxu0 0.0
    %778 = vmatpush1.msra.mxu0 0.0
    %779 = vmatprep.subr.mxu0 0.0
    %780 = vmatpush1.msra.mxu0 0.0
    %781 = vmatprep.subr.mxu0 0.0
    %782 = vmatpush1.msra.mxu0 0.0
    %783 = vmatprep.subr.mxu0 0.0
    %784 = vmatpush1.msra.mxu0 0.0
    %785 = vmatprep.subr.mxu0 0.0
    %786 = vmatpush1.msra.mxu0 0.0
    %787 = vmatprep.subr.mxu0 0.0
    %788 = vmatpush1.msra.mxu0 0.0
    %789 = vmatprep.mubr.f32.mxu0 0.0
    %790 = vmatmul.mubr.f32.gmra.mrb[0].mxu0 %v723
    %v791 = vpop.f32.mrb[0].mxu0
    %v792 = vadd.f32 0.0, %v791
    %v793 = vpop.f32.mrb[0].mxu0
    %794 = vdwg.mxu0
    %v795 = vld [vmem:[%s5] sm:$0xff]
    %796 = vset.pattern.permute.xlu0 0
    %797 = vperm.xlu0 %796, %v795
    %v798 = vpop.permute.xlu0 %797
    %vm799 = vcmp.ge.s32.totalorder %v49, %v798
    %v800 = vld [vmem:[%s6] sm:$0xff]
    %801 = vset.pattern.permute.xlu0 0
    %802 = vperm.xlu0 %801, %v800
    %v803 = vpop.permute.xlu0 %802
    %vm804 = vcmp.lt.s32.totalorder %v49, %v803
    %vm805 = vmand %vm799, %vm804
    %v806 = vsel %vm805, 1, 0
    %v807 = vcvt.s32.f32 %v806
    %v809 = vsel %vm721, %v807, 0
    %811 = vmatprep.subr.mxu0 0.0
    %812 = vmatpush1.msra.mxu0 %v707
    %813 = vmatprep.subr.mxu0 0.0
    %814 = vmatpush1.msra.mxu0 0.0
    %815 = vmatprep.subr.mxu0 0.0
    %816 = vmatpush1.msra.mxu0 0.0
    %817 = vmatprep.subr.mxu0 0.0
    %818 = vmatpush1.msra.mxu0 0.0
    %819 = vmatprep.subr.mxu0 0.0
    %820 = vmatpush1.msra.mxu0 0.0
    %821 = vmatprep.subr.mxu0 0.0
    %822 = vmatpush1.msra.mxu0 0.0
    %823 = vmatprep.subr.mxu0 0.0
    %824 = vmatpush1.msra.mxu0 0.0
    %825 = vmatprep.subr.mxu0 0.0
    %826 = vmatpush1.msra.mxu0 0.0
    %827 = vmatprep.subr.mxu0 0.0
    %828 = vmatpush1.msra.mxu0 0.0
    %829 = vmatprep.subr.mxu0 0.0
    %830 = vmatpush1.msra.mxu0 0.0
    %831 = vmatprep.subr.mxu0 0.0
    %832 = vmatpush1.msra.mxu0 0.0
    %833 = vmatprep.subr.mxu0 0.0
    %834 = vmatpush1.msra.mxu0 0.0
    %835 = vmatprep.subr.mxu0 0.0
    %836 = vmatpush1.msra.mxu0 0.0
    %837 = vmatprep.subr.mxu0 0.0
    %838 = vmatpush1.msra.mxu0 0.0
    %839 = vmatprep.subr.mxu0 0.0
    %840 = vmatpush1.msra.mxu0 0.0
    %841 = vmatprep.subr.mxu0 0.0
    %842 = vmatpush1.msra.mxu0 0.0
    %843 = vmatprep.subr.mxu0 0.0
    %844 = vmatpush1.msra.mxu0 0.0
    %845 = vmatprep.subr.mxu0 0.0
    %846 = vmatpush1.msra.mxu0 0.0
    %847 = vmatprep.subr.mxu0 0.0
    %848 = vmatpush1.msra.mxu0 0.0
    %849 = vmatprep.subr.mxu0 0.0
    %850 = vmatpush1.msra.mxu0 0.0
    %851 = vmatprep.subr.mxu0 0.0
    %852 = vmatpush1.msra.mxu0 0.0
    %853 = vmatprep.subr.mxu0 0.0
    %854 = vmatpush1.msra.mxu0 0.0
    %855 = vmatprep.subr.mxu0 0.0
    %856 = vmatpush1.msra.mxu0 0.0
    %857 = vmatprep.subr.mxu0 0.0
    %858 = vmatpush1.msra.mxu0 0.0
    %859 = vmatprep.subr.mxu0 0.0
    %860 = vmatpush1.msra.mxu0 0.0
    %861 = vmatprep.subr.mxu0 0.0
    %862 = vmatpush1.msra.mxu0 0.0
    %863 = vmatprep.subr.mxu0 0.0
    %864 = vmatpush1.msra.mxu0 0.0
    %865 = vmatprep.subr.mxu0 0.0
    %866 = vmatpush1.msra.mxu0 0.0
    %867 = vmatprep.subr.mxu0 0.0
    %868 = vmatpush1.msra.mxu0 0.0
    %869 = vmatprep.subr.mxu0 0.0
    %870 = vmatpush1.msra.mxu0 0.0
    %871 = vmatprep.subr.mxu0 0.0
    %872 = vmatpush1.msra.mxu0 0.0
    %873 = vmatprep.subr.mxu0 0.0
    %874 = vmatpush1.msra.mxu0 0.0
    %875 = vmatprep.mubr.f32.mxu0 0.0
    %876 = vmatmul.mubr.f32.gmra.mrb[0].mxu0 %v809
    %v877 = vpop.f32.mrb[0].mxu0
    %v878 = vadd.f32 0.0, %v877
    %v879 = vpop.f32.mrb[0].mxu0
    %880 = vdwg.mxu0
    %v881 = vld [vmem:[%s11] sm:$0xff]
    %v882 = vld [vmem:[%s11 + $0x8] sm:$0xff]
    %v883 = vld [vmem:[%s11 + $0x10] sm:$0xff]
    %v884 = vld [vmem:[%s11 + $0x18] sm:$0xff]
    %v885 = vld [vmem:[%s11 + $0x20] sm:$0xff]
    %v886 = vld [vmem:[%s11 + $0x28] sm:$0xff]
    %v887 = vld [vmem:[%s11 + $0x30] sm:$0xff]
    %v888 = vld [vmem:[%s11 + $0x38] sm:$0xff]
    %v890 = vsel %vm193, %v792, 0
    %892 = vmatprep.subr.mxu0 0.0
    %893 = vmatpush1.msra.mxu0 %v885
    %894 = vmatprep.subr.mxu0 0.0
    %895 = vmatpush1.msra.mxu0 %v886
    %896 = vmatprep.subr.mxu0 0.0
    %897 = vmatpush1.msra.mxu0 %v887
    %898 = vmatprep.subr.mxu0 0.0
    %899 = vmatpush1.msra.mxu0 %v888
    %900 = vmatprep.subr.mxu0 0.0
    %901 = vmatpush1.msra.mxu0 0.0
    %902 = vmatprep.subr.mxu0 0.0
    %903 = vmatpush1.msra.mxu0 0.0
    %904 = vmatprep.subr.mxu0 0.0
    %905 = vmatpush1.msra.mxu0 0.0
    %906 = vmatprep.subr.mxu0 0.0
    %907 = vmatpush1.msra.mxu0 0.0
    %908 = vmatprep.subr.mxu0 0.0
    %909 = vmatpush1.msra.mxu0 0.0
    %910 = vmatprep.subr.mxu0 0.0
    %911 = vmatpush1.msra.mxu0 0.0
    %912 = vmatprep.subr.mxu0 0.0
    %913 = vmatpush1.msra.mxu0 0.0
    %914 = vmatprep.subr.mxu0 0.0
    %915 = vmatpush1.msra.mxu0 0.0
    %916 = vmatprep.subr.mxu0 0.0
    %917 = vmatpush1.msra.mxu0 0.0
    %918 = vmatprep.subr.mxu0 0.0
    %919 = vmatpush1.msra.mxu0 0.0
    %920 = vmatprep.subr.mxu0 0.0
    %921 = vmatpush1.msra.mxu0 0.0
    %922 = vmatprep.subr.mxu0 0.0
    %923 = vmatpush1.msra.mxu0 0.0
    %924 = vmatprep.subr.mxu0 0.0
    %925 = vmatpush1.msra.mxu0 0.0
    %926 = vmatprep.subr.mxu0 0.0
    %927 = vmatpush1.msra.mxu0 0.0
    %928 = vmatprep.subr.mxu0 0.0
    %929 = vmatpush1.msra.mxu0 0.0
    %930 = vmatprep.subr.mxu0 0.0
    %931 = vmatpush1.msra.mxu0 0.0
    %932 = vmatprep.subr.mxu0 0.0
    %933 = vmatpush1.msra.mxu0 0.0
    %934 = vmatprep.subr.mxu0 0.0
    %935 = vmatpush1.msra.mxu0 0.0
    %936 = vmatprep.subr.mxu0 0.0
    %937 = vmatpush1.msra.mxu0 0.0
    %938 = vmatprep.subr.mxu0 0.0
    %939 = vmatpush1.msra.mxu0 0.0
    %940 = vmatprep.subr.mxu0 0.0
    %941 = vmatpush1.msra.mxu0 0.0
    %942 = vmatprep.subr.mxu0 0.0
    %943 = vmatpush1.msra.mxu0 0.0
    %944 = vmatprep.subr.mxu0 0.0
    %945 = vmatpush1.msra.mxu0 0.0
    %946 = vmatprep.subr.mxu0 0.0
    %947 = vmatpush1.msra.mxu0 0.0
    %948 = vmatprep.subr.mxu0 0.0
    %949 = vmatpush1.msra.mxu0 0.0
    %950 = vmatprep.subr.mxu0 0.0
    %951 = vmatpush1.msra.mxu0 0.0
    %952 = vmatprep.subr.mxu0 0.0
    %953 = vmatpush1.msra.mxu0 0.0
    %954 = vmatprep.subr.mxu0 0.0
    %955 = vmatpush1.msra.mxu0 0.0
    %956 = vmatprep.mubr.f32.mxu0 0.0
    %957 = vmatmul.mubr.f32.gmra.mrb[0].mxu0 %v890
    %v958 = vpop.f32.mrb[0].mxu0
    %v959 = vadd.f32 0.0, %v958
    %v960 = vpop.f32.mrb[0].mxu0
    %961 = vdwg.mxu0
    %v963 = vsel %vm193, %v267, 0
    %965 = vmatprep.subr.mxu0 0.0
    %966 = vmatpush1.msra.mxu0 %v881
    %967 = vmatprep.subr.mxu0 0.0
    %968 = vmatpush1.msra.mxu0 %v882
    %969 = vmatprep.subr.mxu0 0.0
    %970 = vmatpush1.msra.mxu0 %v883
    %971 = vmatprep.subr.mxu0 0.0
    %972 = vmatpush1.msra.mxu0 %v884
    %973 = vmatprep.subr.mxu0 0.0
    %974 = vmatpush1.msra.mxu0 0.0
    %975 = vmatprep.subr.mxu0 0.0
    %976 = vmatpush1.msra.mxu0 0.0
    %977 = vmatprep.subr.mxu0 0.0
    %978 = vmatpush1.msra.mxu0 0.0
    %979 = vmatprep.subr.mxu0 0.0
    %980 = vmatpush1.msra.mxu0 0.0
    %981 = vmatprep.subr.mxu0 0.0
    %982 = vmatpush1.msra.mxu0 0.0
    %983 = vmatprep.subr.mxu0 0.0
    %984 = vmatpush1.msra.mxu0 0.0
    %985 = vmatprep.subr.mxu0 0.0
    %986 = vmatpush1.msra.mxu0 0.0
    %987 = vmatprep.subr.mxu0 0.0
    %988 = vmatpush1.msra.mxu0 0.0
    %989 = vmatprep.subr.mxu0 0.0
    %990 = vmatpush1.msra.mxu0 0.0
    %991 = vmatprep.subr.mxu0 0.0
    %992 = vmatpush1.msra.mxu0 0.0
    %993 = vmatprep.subr.mxu0 0.0
    %994 = vmatpush1.msra.mxu0 0.0
    %995 = vmatprep.subr.mxu0 0.0
    %996 = vmatpush1.msra.mxu0 0.0
    %997 = vmatprep.subr.mxu0 0.0
    %998 = vmatpush1.msra.mxu0 0.0
    %999 = vmatprep.subr.mxu0 0.0
    %1000 = vmatpush1.msra.mxu0 0.0
    %1001 = vmatprep.subr.mxu0 0.0
    %1002 = vmatpush1.msra.mxu0 0.0
    %1003 = vmatprep.subr.mxu0 0.0
    %1004 = vmatpush1.msra.mxu0 0.0
    %1005 = vmatprep.subr.mxu0 0.0
    %1006 = vmatpush1.msra.mxu0 0.0
    %1007 = vmatprep.subr.mxu0 0.0
    %1008 = vmatpush1.msra.mxu0 0.0
    %1009 = vmatprep.subr.mxu0 0.0
    %1010 = vmatpush1.msra.mxu0 0.0
    %1011 = vmatprep.subr.mxu0 0.0
    %1012 = vmatpush1.msra.mxu0 0.0
    %1013 = vmatprep.subr.mxu0 0.0
    %1014 = vmatpush1.msra.mxu0 0.0
    %1015 = vmatprep.subr.mxu0 0.0
    %1016 = vmatpush1.msra.mxu0 0.0
    %1017 = vmatprep.subr.mxu0 0.0
    %1018 = vmatpush1.msra.mxu0 0.0
    %1019 = vmatprep.subr.mxu0 0.0
    %1020 = vmatpush1.msra.mxu0 0.0
    %1021 = vmatprep.subr.mxu0 0.0
    %1022 = vmatpush1.msra.mxu0 0.0
    %1023 = vmatprep.subr.mxu0 0.0
    %1024 = vmatpush1.msra.mxu0 0.0
    %1025 = vmatprep.subr.mxu0 0.0
    %1026 = vmatpush1.msra.mxu0 0.0
    %1027 = vmatprep.subr.mxu0 0.0
    %1028 = vmatpush1.msra.mxu0 0.0
    %1029 = vmatprep.mubr.f32.mxu0 0.0
    %1030 = vmatmul.mubr.f32.gmra.mrb[0].mxu0 %v963
    %v1031 = vpop.f32.mrb[0].mxu0
    %v1032 = vadd.f32 %v959, %v1031
    %v1033 = vpop.f32.mrb[0].mxu0
    %1034 = vdwg.mxu0
    %v1035 = vld [vmem:[%s11 + $0x40] sm:$0xff]
    %v1036 = vld [vmem:[%s11 + $0x48] sm:$0xff]
    %v1037 = vld [vmem:[%s11 + $0x50] sm:$0xff]
    %v1038 = vld [vmem:[%s11 + $0x58] sm:$0xff]
    %v1040 = vsel %vm193, %v878, 0
    %1042 = vmatprep.subr.mxu0 0.0
    %1043 = vmatpush1.msra.mxu0 %v1035
    %1044 = vmatprep.subr.mxu0 0.0
    %1045 = vmatpush1.msra.mxu0 %v1036
    %1046 = vmatprep.subr.mxu0 0.0
    %1047 = vmatpush1.msra.mxu0 %v1037
    %1048 = vmatprep.subr.mxu0 0.0
    %1049 = vmatpush1.msra.mxu0 %v1038
    %1050 = vmatprep.subr.mxu0 0.0
    %1051 = vmatpush1.msra.mxu0 0.0
    %1052 = vmatprep.subr.mxu0 0.0
    %1053 = vmatpush1.msra.mxu0 0.0
    %1054 = vmatprep.subr.mxu0 0.0
    %1055 = vmatpush1.msra.mxu0 0.0
    %1056 = vmatprep.subr.mxu0 0.0
    %1057 = vmatpush1.msra.mxu0 0.0
    %1058 = vmatprep.subr.mxu0 0.0
    %1059 = vmatpush1.msra.mxu0 0.0
    %1060 = vmatprep.subr.mxu0 0.0
    %1061 = vmatpush1.msra.mxu0 0.0
    %1062 = vmatprep.subr.mxu0 0.0
    %1063 = vmatpush1.msra.mxu0 0.0
    %1064 = vmatprep.subr.mxu0 0.0
    %1065 = vmatpush1.msra.mxu0 0.0
    %1066 = vmatprep.subr.mxu0 0.0
    %1067 = vmatpush1.msra.mxu0 0.0
    %1068 = vmatprep.subr.mxu0 0.0
    %1069 = vmatpush1.msra.mxu0 0.0
    %1070 = vmatprep.subr.mxu0 0.0
    %1071 = vmatpush1.msra.mxu0 0.0
    %1072 = vmatprep.subr.mxu0 0.0
    %1073 = vmatpush1.msra.mxu0 0.0
    %1074 = vmatprep.subr.mxu0 0.0
    %1075 = vmatpush1.msra.mxu0 0.0
    %1076 = vmatprep.subr.mxu0 0.0
    %1077 = vmatpush1.msra.mxu0 0.0
    %1078 = vmatprep.subr.mxu0 0.0
    %1079 = vmatpush1.msra.mxu0 0.0
    %1080 = vmatprep.subr.mxu0 0.0
    %1081 = vmatpush1.msra.mxu0 0.0
    %1082 = vmatprep.subr.mxu0 0.0
    %1083 = vmatpush1.msra.mxu0 0.0
    %1084 = vmatprep.subr.mxu0 0.0
    %1085 = vmatpush1.msra.mxu0 0.0
    %1086 = vmatprep.subr.mxu0 0.0
    %1087 = vmatpush1.msra.mxu0 0.0
    %1088 = vmatprep.subr.mxu0 0.0
    %1089 = vmatpush1.msra.mxu0 0.0
    %1090 = vmatprep.subr.mxu0 0.0
    %1091 = vmatpush1.msra.mxu0 0.0
    %1092 = vmatprep.subr.mxu0 0.0
    %1093 = vmatpush1.msra.mxu0 0.0
    %1094 = vmatprep.subr.mxu0 0.0
    %1095 = vmatpush1.msra.mxu0 0.0
    %1096 = vmatprep.subr.mxu0 0.0
    %1097 = vmatpush1.msra.mxu0 0.0
    %1098 = vmatprep.subr.mxu0 0.0
    %1099 = vmatpush1.msra.mxu0 0.0
    %1100 = vmatprep.subr.mxu0 0.0
    %1101 = vmatpush1.msra.mxu0 0.0
    %1102 = vmatprep.subr.mxu0 0.0
    %1103 = vmatpush1.msra.mxu0 0.0
    %1104 = vmatprep.subr.mxu0 0.0
    %1105 = vmatpush1.msra.mxu0 0.0
    %1106 = vmatprep.mubr.f32.mxu0 0.0
    %1107 = vmatmul.mubr.f32.gmra.mrb[0].mxu0 %v1040
    %v1108 = vpop.f32.mrb[0].mxu0
    %v1109 = vadd.f32 0.0, %v1108
    %v1110 = vpop.f32.mrb[0].mxu0
    %1111 = vdwg.mxu0
    %v1112 = vadd.f32 %v1032, %v1109
    %v1113 = vld [vmem:[%s12] sm:$0x1]
    %v1115 = vlaneseq
    %v1116 = vshrl.u32 %v1115, 7
    %v1117 = vsub.s32 0, %v1116
    %v1118 = vrot.slane %v1113, %v1117
    %v1120 = vadd.f32 %v1112, %v1118
    %v1121 = vld [vmem:[%s7] sm:$0xff]
    %1122 = vset.pattern.permute.xlu0 0
    %1123 = vperm.xlu0 %1122, %v1121
    %v1124 = vpop.permute.xlu0 %1123
    %vm1125 = vcmp.eq.s32.totalorder %v49, %v1124
    %v1126 = vsel %vm1125, 1, 0
    %v1127 = vcvt.s32.f32 %v1126
    %v1128 = vsel %vm721, %v1120, -inf
    %1129 = vmax.xlane.f32.xlu0 %v1128
    %v1130 = vpop.xlane.xlu0 %1129
    %v1131 = vsub.f32 %v1120, %v1130
    %v1132 = vmul.f32 %v1131, 1.442695
    %v1133 = vpow.pop %v1132
    %v1134 = vsel %vm721, %v1133, 0.0
    %1135 = vadd.xlane.f32.xlu0 %v1134
    %v1136 = vpop.xlane.xlu0 %1135
    %v1137 = vlog2.pop %v1136
    %v1138 = vmul.f32 %v1137, 0.6931472
    %v1139 = vsub.f32 %v1131, %v1138
    %v1140 = vmul.f32 %v1127, %v1139
    %v1141 = vsel %vm721, %v1140, 0.0
    %1142 = vadd.xlane.f32.xlu0 %v1141
    %v1143 = vpop.xlane.xlu0 %1142
    %v1144 = vsub.f32 0.0, %v1143
    %v1145 = vrot.slane %v1144, 4
    %v1146 = vadd.f32 %v1144, %v1145
    %v1147 = vrot.slane %v1146, 2
    %v1148 = vadd.f32 %v1146, %v1147
    %v1149 = vrot.slane %v1148, 1
    %v1150 = vadd.f32 %v1148, %v1149
    %v1151 = vmul.f32 %v1150, 0.25
    %vm1152 = vcmask 0
    %1153 = vst.msk [vmem:[#allocation2] sm:$0x1] %vm1152, %v1151
    %vm1154 = vcmp.eq.f32.partialorder %v1120, %v1130
    %v1155 = vsel %vm1154, %v49, 8
    %v1156 = vsel %vm721, %v1155, 2147483647
    %v1157 = vand.u32 %v1156, 65535
    %v1158 = vshra.s32 %v1156, 16
    %v1159 = vcvt.s32.f32 %v1157
    %v1160 = vcvt.s32.f32 %v1158
    %1161 = vmin.xlane.f32.xlu0 %v1160
    %v1162 = vpop.xlane.xlu0 %1161
    %vm1163 = vcmp.eq.f32.partialorder %v1160, %v1162
    %v1164 = vsel %vm1163, %v1159, inf
    %1165 = vmin.xlane.f32.xlu0 %v1164
    %v1166 = vpop.xlane.xlu0 %1165
    %v1167 = vcvt.f32.s32 %v1166
    %v1168 = vcvt.f32.s32 %v1162
    %v1169 = vshll.u32 %v1168, 16
    %v1170 = vadd.s32 %v1169, %v1167
    %vm1171 = vcmask 7168
    %1172 = vst.msk [vmem:[%s13] sm:$0xff] %vm1171, %v1170
    // Predicated region
    $region54: #{_prover_call.1} parent=1 // pred_check
      _
    $region55: #{_prover_call.1} parent=1 // pred_check_branch
      %1174 = sbr.rel (0) target = $region57
    $region56: #{_prover_call.1} parent=1 // pred_region
      _
    $region57: #{_prover_call.1} parent=1 // pred_fallthru
      _
    // Predicated region
    $region58: #{_prover_call.1} parent=1 // pred_check
      _
    $region59: #{_prover_call.1} parent=1 // pred_check_branch
      %1176 = sbr.rel (0) target = $region61
    $region60: #{_prover_call.1} parent=1 // pred_region
      %s1178 = ssub.s32 16, 16
      %1179 = vsyncadd [#allocation3], %s1178
      %s1181 = sshll.u32 [#allocation2], 4
      %s1182 = int_to_ptr.vmem [resolvable:$true] %s1181
      %1184 = dma.vmem_to_hbm [thread:$0]  %s1182, 16, %s14, [#allocation3]
    $region61: #{_prover_call.1} parent=1 // pred_fallthru
      _
    // Predicated region
    $region62: #{_prover_call.1} parent=1 // pred_check
      _
    $region63: #{_prover_call.1} parent=1 // pred_check_branch
      %1186 = sbr.rel (0) target = $region65
    $region64: #{_prover_call.1} parent=1 // pred_region
      _
    $region65: #{_prover_call.1} parent=1 // pred_fallthru
      _
    // Predicated region
    $region66: #{_prover_call.1} parent=1 // pred_check
      _
    $region67: #{_prover_call.1} parent=1 // pred_check_branch
      %1188 = sbr.rel (0) target = $region69
    $region68: #{_prover_call.1} parent=1 // pred_region
      %1189 = dma.done [#allocation3], 16
    $region69: #{_prover_call.1} parent=1 // pred_fallthru
      _
    %1190 = vsyncpa [#allocation3], 1

</llo_original>
